<compile_context>
chip_gen: v6e
topology: v6e:2x2x1
jax: 0.10.0
libtpu: 0.0.40
codegen_flags: <defaults>
</compile_context>

<pallas_src>
import functools

import jax
import jax.numpy as jnp
from jax import lax
from jax.experimental import pallas as pl
from jax.experimental.pallas import tpu as pltpu


def _round_up(x, m):
    return ((x + m - 1) // m) * m


def _vmem_spec():
    return pl.BlockSpec(memory_space=pltpu.MemorySpace.VMEM)


# ---------------------------------------------------------------------------
# Kernels
# ---------------------------------------------------------------------------

def _lstm_seq_kernel(x_ref, wih_ref, whh_ref, b_ref, out_ref, gates_ref,
                     *, seq_len, batch):
    """One LSTM layer over the full sequence in a single kernel invocation.

    x_ref:     (T*B, Din)  bf16  time-major, rows grouped per timestep
    wih_ref:   (Din, 4*Hp) bf16  pre-transposed, gate order (i,f,g,o), lane-padded
    whh_ref:   (Hp,  4*Hp) bf16
    b_ref:     (1,   4*Hp) f32   b_ih + b_hh (zero in padded lanes)
    out_ref:   (T*B, Hp)   bf16  hidden sequence (input of the next layer)
    gates_ref: (T*B, 4*Hp) f32   scratch: hoisted input projection
    """
    T, B = seq_len, batch
    Hp = whh_ref.shape[0]

    # Phase 1: hoisted input projection — one big MXU matmul for ALL timesteps.
    gates_ref[...] = (
        jnp.dot(x_ref[...], wih_ref[...], preferred_element_type=jnp.float32)
        + b_ref[...])

    whh = whh_ref[...]  # resident in VMEM for the whole recurrence

    # Phase 2: sequential recurrence — only h_prev @ W_hh on the critical path.
    def step(t, carry):
        h, c = carry
        row = pl.multiple_of(t * B, B)
        g = gates_ref[pl.ds(row, B), :] + jnp.dot(
            h.astype(jnp.bfloat16), whh, preferred_element_type=jnp.float32)
        i_g = jax.nn.sigmoid(g[:, 0 * Hp:1 * Hp])   # 128-lane aligned slices
        f_g = jax.nn.sigmoid(g[:, 1 * Hp:2 * Hp])
        g_g = jnp.tanh(g[:, 2 * Hp:3 * Hp])
        o_g = jax.nn.sigmoid(g[:, 3 * Hp:4 * Hp])
        c = f_g * c + i_g * g_g
        h = o_g * jnp.tanh(c)
        out_ref[pl.ds(row, B), :] = h.astype(out_ref.dtype)
        return h, c

    h0 = jnp.zeros((B, Hp), jnp.float32)
    c0 = jnp.zeros((B, Hp), jnp.float32)
    lax.fori_loop(0, T, step, (h0, c0), unroll=True)


def _lstm_final_kernel(x_ref, wih_ref, whh_ref, b_ref, wfc_ref, bfc_ref,
                       out_ref, gates_ref, *, seq_len, batch):
    """Last LSTM layer fused with the final nn.Linear.

    Only h_T is needed, so the per-timestep hidden sequence never leaves VMEM.
    out_ref: (B, Op) f32
    """
    T, B = seq_len, batch
    Hp = whh_ref.shape[0]

    gates_ref[...] = (
        jnp.dot(x_ref[...], wih_ref[...], preferred_element_type=jnp.float32)
        + b_ref[...])

    whh = whh_ref[...]

    def step(t, carry):
        h, c = carry
        row = pl.multiple_of(t * B, B)
        g = gates_ref[pl.ds(row, B), :] + jnp.dot(
            h.astype(jnp.bfloat16), whh, preferred_element_type=jnp.float32)
        i_g = jax.nn.sigmoid(g[:, 0 * Hp:1 * Hp])
        f_g = jax.nn.sigmoid(g[:, 1 * Hp:2 * Hp])
        g_g = jnp.tanh(g[:, 2 * Hp:3 * Hp])
        o_g = jax.nn.sigmoid(g[:, 3 * Hp:4 * Hp])
        c = f_g * c + i_g * g_g
        h = o_g * jnp.tanh(c)
        return h, c

    h0 = jnp.zeros((B, Hp), jnp.float32)
    c0 = jnp.zeros((B, Hp), jnp.float32)
    h_T, _ = lax.fori_loop(0, T, step, (h0, c0), unroll=True)

    out_ref[...] = (jnp.dot(h_T.astype(jnp.bfloat16), wfc_ref[...],
                            preferred_element_type=jnp.float32)
                    + bfc_ref[...]).astype(out_ref.dtype)


# ---------------------------------------------------------------------------
# Wrappers
# ---------------------------------------------------------------------------

def lstm_layer_seq(x2d, wih_t, whh_t, bias, *, seq_len, batch):
    """x2d: (T*B, Din) bf16 -> (T*B, Hp) bf16 hidden sequence."""
    TB = x2d.shape[0]
    Hp = whh_t.shape[0]
    kernel = functools.partial(_lstm_seq_kernel, seq_len=seq_len, batch=batch)
    return pl.pallas_call(
        kernel,
        out_shape=jax.ShapeDtypeStruct((TB, Hp), jnp.bfloat16),
        in_specs=[_vmem_spec() for _ in range(4)],
        out_specs=_vmem_spec(),
        scratch_shapes=[pltpu.VMEM((TB, 4 * Hp), jnp.float32)],
    )(x2d, wih_t, whh_t, bias)


def lstm_layer_final(x2d, wih_t, whh_t, bias, wfc_t, bfc, *, seq_len, batch):
    """Last layer + fused FC: (T*B, Din) bf16 -> (B, Op) f32."""
    TB = x2d.shape[0]
    Hp = whh_t.shape[0]
    Op = wfc_t.shape[1]
    kernel = functools.partial(_lstm_final_kernel, seq_len=seq_len, batch=batch)
    return pl.pallas_call(
        kernel,
        out_shape=jax.ShapeDtypeStruct((batch, Op), jnp.float32),
        in_specs=[_vmem_spec() for _ in range(6)],
        out_specs=_vmem_spec(),
        scratch_shapes=[pltpu.VMEM((TB, 4 * Hp), jnp.float32)],
    )(x2d, wih_t, whh_t, bias, wfc_t, bfc)


# ---------------------------------------------------------------------------
# Parameters (PyTorch layout) and padded/bf16 preparation
# ---------------------------------------------------------------------------

def init_params(key, input_dim, hidden_dim, layer_dim, output_dim):
    """Raw PyTorch-shaped params: per layer W_ih(4H,Din), W_hh(4H,H), b_ih(4H), b_hh(4H)."""
    H = hidden_dim
    k = 1.0 / jnp.sqrt(jnp.float32(H))
    layers = []
    for layer in range(layer_dim):
        d_in = input_dim if layer == 0 else H
        key, k1, k2, k3, k4 = jax.random.split(key, 5)
        layers.append(dict(
            w_ih=jax.random.uniform(k1, (4 * H, d_in), jnp.float32, -k, k),
            w_hh=jax.random.uniform(k2, (4 * H, H), jnp.float32, -k, k),
            b_ih=jax.random.uniform(k3, (4 * H,), jnp.float32, -k, k),
            b_hh=jax.random.uniform(k4, (4 * H,), jnp.float32, -k, k)))
    key, k5, k6 = jax.random.split(key, 3)
    w_fc = jax.random.uniform(k5, (output_dim, H), jnp.float32, -k, k)
    b_fc = jax.random.uniform(k6, (output_dim,), jnp.float32, -k, k)
    return {"layers": layers, "w_fc": w_fc, "b_fc": b_fc}


def _pad_gate_weight(w, H, Hp, d_in, d_in_pad):
    """(4H, d_in) PyTorch gate-ordered weight -> (d_in_pad, 4*Hp) transposed, zero-padded per gate."""
    w4 = w.reshape(4, H, d_in)
    w4p = jnp.zeros((4, Hp, d_in_pad), jnp.float32).at[:, :H, :d_in].set(w4)
    return w4p.reshape(4 * Hp, d_in_pad).T


def _pad_gate_bias(b, H, Hp):
    b4 = b.reshape(4, H)
    b4p = jnp.zeros((4, Hp), jnp.float32).at[:, :H].set(b4)
    return b4p.reshape(1, 4 * Hp)


def prepare_params(raw, input_dim, hidden_dim, output_dim):
    """Pad to lane/sublane boundaries, transpose, cast weights to bf16 (state stays f32)."""
    H = hidden_dim
    Hp = _round_up(H, 128)
    Op = _round_up(output_dim, 128)
    d0_pad = _round_up(input_dim, 128)
    layers = []
    for li, lp in enumerate(raw["layers"]):
        d_in = input_dim if li == 0 else H
        d_in_pad = d0_pad if li == 0 else Hp
        layers.append(dict(
            wih_t=_pad_gate_weight(lp["w_ih"], H, Hp, d_in, d_in_pad).astype(jnp.bfloat16),
            whh_t=_pad_gate_weight(lp["w_hh"], H, Hp, H, Hp).astype(jnp.bfloat16),
            bias=_pad_gate_bias(lp["b_ih"] + lp["b_hh"], H, Hp)))          # f32
    wfc_t = (jnp.zeros((Hp, Op), jnp.float32)
             .at[:H, :output_dim].set(raw["w_fc"].T).astype(jnp.bfloat16))
    bfc = jnp.zeros((1, Op), jnp.float32).at[0, :output_dim].set(raw["b_fc"])
    return {"layers": layers, "wfc_t": wfc_t, "bfc": bfc,
            "Hp": Hp, "Op": Op, "d0_pad": d0_pad}


# ---------------------------------------------------------------------------
# Forward pass (equivalent of LSTMModel.forward: x (B, T, D) -> (B, output_dim))
# ---------------------------------------------------------------------------

def lstm_model_forward(prepped, x_btd, output_dim):
    B, T, D = x_btd.shape
    Bp = _round_up(B, 8)
    D0p = prepped["d0_pad"]

    # time-major, pad batch/features, flatten to (T*Bp, D0p), cast MXU input to bf16
    x_t = jnp.transpose(x_btd, (1, 0, 2))                               # (T, B, D)
    x_p = jnp.zeros((T, Bp, D0p), jnp.float32).at[:, :B, :D].set(x_t)
    seq = x_p.reshape(T * Bp, D0p).astype(jnp.bfloat16)

    layers = prepped["layers"]
    for lp in layers[:-1]:
        seq = lstm_layer_seq(seq, lp["wih_t"], lp["whh_t"], lp["bias"],
                             seq_len=T, batch=Bp)
        # TODO(synk): inter-layer dropout (training only) -> identity at inference.

    lp = layers[-1]
    out_p = lstm_layer_final(seq, lp["wih_t"], lp["whh_t"], lp["bias"],
                             prepped["wfc_t"], prepped["bfc"],
                             seq_len=T, batch=Bp)                       # (Bp, Op)
    return out_p[:B, :output_dim]


# ---------------------------------------------------------------------------
# Pure-JAX references
# ---------------------------------------------------------------------------

def _reference_f32(raw, x, hidden_dim):
    """Exact PyTorch-semantics reference in f32 (no padding, no bf16)."""
    H = hidden_dim
    B, T, _ = x.shape
    seq = x
    for lp in raw["layers"]:
        wih_t, whh_t = lp["w_ih"].T, lp["w_hh"].T
        bias = (lp["b_ih"] + lp["b_hh"])[None, :]
        h = jnp.zeros((B, H), jnp.float32)
        c = jnp.zeros((B, H), jnp.float32)
        outs = []
        for t in range(T):
            g = seq[:, t, :] @ wih_t + h @ whh_t + bias
            i = jax.nn.sigmoid(g[:, 0 * H:1 * H])
            f = jax.nn.sigmoid(g[:, 1 * H:2 * H])
            gg = jnp.tanh(g[:, 2 * H:3 * H])
            o = jax.nn.sigmoid(g[:, 3 * H:4 * H])
            c = f * c + i * gg
            h = o * jnp.tanh(c)
            outs.append(h)
        seq = jnp.stack(outs, axis=1)
    return seq[:, -1, :] @ raw["w_fc"].T + raw["b_fc"][None, :]


def _reference_bf16_matched(raw, x, hidden_dim):
    """Reference mimicking the kernel numerics: bf16 MXU inputs, f32 accum/state."""
    H = hidden_dim
    B, T, _ = x.shape
    bf = jnp.bfloat16
    seq = jnp.transpose(x, (1, 0, 2)).astype(bf)          # (T, B, D)
    h_last = None
    for lp in raw["layers"]:
        wih_t = lp["w_ih"].T.astype(bf)
        whh_t = lp["w_hh"].T.astype(bf)
        bias = (lp["b_ih"] + lp["b_hh"]).astype(jnp.float32)[None, :]
        gates_in = jnp.einsum("tbd,dg->tbg", seq, wih_t,
                              preferred_element_type=jnp.float32) + bias
        h = jnp.zeros((B, H), jnp.float32)
        c = jnp.zeros((B, H), jnp.float32)
        outs = []
        for t in range(T):
            g = gates_in[t] + jnp.dot(h.astype(bf), whh_t,
                                      preferred_element_type=jnp.float32)
            i = jax.nn.sigmoid(g[:, 0 * H:1 * H])
            f = jax.nn.sigmoid(g[:, 1 * H:2 * H])
            gg = jnp.tanh(g[:, 2 * H:3 * H])
            o = jax.nn.sigmoid(g[:, 3 * H:4 * H])
            c = f * c + i * gg
            h = o * jnp.tanh(c)
            outs.append(h)
        h_last = h
        seq = jnp.stack(outs, axis=0).astype(bf)
    return (jnp.dot(h_last.astype(bf), raw["w_fc"].T.astype(bf),
                    preferred_element_type=jnp.float32)
            + raw["b_fc"][None, :])


if __name__ == "__main__":
    # Small shapes consistent with the module's forward.
    batch, seq_len = 2, 8
    input_dim, hidden_dim, layer_dim, output_dim = 4, 32, 2, 8
    dropout_prob = 0.1  # identity at inference

    key = jax.random.PRNGKey(0)
    key, pkey, xkey = jax.random.split(key, 3)
    raw = init_params(pkey, input_dim, hidden_dim, layer_dim, output_dim)
    prepped = prepare_params(raw, input_dim, hidden_dim, output_dim)
    x = jax.random.normal(xkey, (batch, seq_len, input_dim), jnp.float32)

    out = lstm_model_forward(prepped, x, output_dim)
    out = jax.block_until_ready(out)
    assert out.shape == (batch, output_dim), out.shape

    # Tight check vs a bf16-matched reference (validates kernel structure, padding
    # inertness, gate order, recurrence, fused FC).
    ref_m = _reference_bf16_matched(raw, x, hidden_dim)
    assert jnp.allclose(out, ref_m, atol=1e-3, rtol=1e-3), (out, ref_m)

    # Looser check vs exact f32 PyTorch semantics (bounds bf16 quantization error).
    ref_f = _reference_f32(raw, x, hidden_dim)
    assert jnp.allclose(out, ref_f, atol=3e-2, rtol=3e-2), (out, ref_f)

    print("KERNEL_OK")
</pallas_src>

<mosaic_0001>
module attributes {stable_mosaic.version = 11 : i64} {
  func.func @_lstm_seq_kernel(%arg0: memref<64x128xbf16, #tpu.memory_space<vmem>>, %arg1: memref<128x512xbf16, #tpu.memory_space<vmem>>, %arg2: memref<128x512xbf16, #tpu.memory_space<vmem>>, %arg3: memref<1x512xf32, #tpu.memory_space<vmem>>, %arg4: memref<64x128xbf16, #tpu.memory_space<vmem>>, %arg5: memref<64x512xf32, #tpu.memory_space<vmem>>) attributes {dimension_semantics = [], scalar_prefetch = 0 : i64, scratch_operands = 1 : i64, tpu.core_type = #tpu.core_type<tc>} {
    %c0 = arith.constant 0 : index
    %c0_0 = arith.constant 0 : index
    %0 = vector.load %arg0[%c0, %c0_0] : memref<64x128xbf16, #tpu.memory_space<vmem>>, vector<64x128xbf16>
    %c0_1 = arith.constant 0 : index
    %c0_2 = arith.constant 0 : index
    %1 = vector.load %arg1[%c0_1, %c0_2] : memref<128x512xbf16, #tpu.memory_space<vmem>>, vector<128x512xbf16>
    %cst = arith.constant dense<0.000000e+00> : vector<64x512xf32>
    %2 = tpu.matmul %0, %1, %cst {dimension_numbers = #tpu.dot_dimension_numbers<[1], [0], [0], [1], [0, 0, 1, 1], [], []>} : vector<64x128xbf16>, vector<128x512xbf16>, vector<64x512xf32> -> vector<64x512xf32>
    %c0_3 = arith.constant 0 : index
    %c0_4 = arith.constant 0 : index
    %3 = vector.load %arg3[%c0_3, %c0_4] : memref<1x512xf32, #tpu.memory_space<vmem>>, vector<1x512xf32>
    %4 = vector.broadcast %3 : vector<1x512xf32> to vector<64x512xf32>
    %5 = arith.addf %2, %4 : vector<64x512xf32>
    %c0_5 = arith.constant 0 : index
    %c0_6 = arith.constant 0 : index
    %6 = vector.load %arg5[%c0_5, %c0_6] : memref<64x512xf32, #tpu.memory_space<vmem>>, vector<64x512xf32>
    tpu.vector_store %arg5[%c0_5, %c0_6], %5 {strides = array<i32>} : memref<64x512xf32, #tpu.memory_space<vmem>>, vector<64x512xf32>,
    %c0_7 = arith.constant 0 : index
    %c0_8 = arith.constant 0 : index
    %7 = vector.load %arg2[%c0_7, %c0_8] : memref<128x512xbf16, #tpu.memory_space<vmem>>, vector<128x512xbf16>
    %cst_9 = arith.constant 0.000000e+00 : f32
    %8 = vector.broadcast %cst_9 : f32 to vector<8x128xf32>
    %cst_10 = arith.constant 0.000000e+00 : f32
    %9 = vector.broadcast %cst_10 : f32 to vector<8x128xf32>
    %c0_i32 = arith.constant 0 : i32
    %c8_i32 = arith.constant 8 : i32
    %10 = arith.muli %c0_i32, %c8_i32 : i32
    %11 = tpu.assume_multiple %10, 8 : i32
    %12 = arith.index_cast %11 : i32 to index
    %c0_11 = arith.constant 0 : index
    %13 = vector.load %arg5[%12, %c0_11] : memref<64x512xf32, #tpu.memory_space<vmem>>, vector<8x512xf32>
    %14 = arith.truncf %8 : vector<8x128xf32> to vector<8x128xbf16>
    %cst_12 = arith.constant dense<0.000000e+00> : vector<8x512xf32>
    %15 = tpu.matmul %14, %7, %cst_12 {dimension_numbers = #tpu.dot_dimension_numbers<[1], [0], [0], [1], [0, 0, 1, 1], [], []>} : vector<8x128xbf16>, vector<128x512xbf16>, vector<8x512xf32> -> vector<8x512xf32>
    %16 = arith.addf %13, %15 : vector<8x512xf32>
    %17 = vector.extract_strided_slice %16 {offsets = [0, 0], sizes = [8, 128], strides = [1, 1]} : vector<8x512xf32> to vector<8x128xf32>
    %18 = arith.negf %17 : vector<8x128xf32>
    %19 = math.exp %18 : vector<8x128xf32>
    %cst_13 = arith.constant 1.000000e+00 : f32
    %20 = vector.broadcast %cst_13 : f32 to vector<8x128xf32>
    %21 = arith.addf %20, %19 : vector<8x128xf32>
    %22 = arith.divf %20, %21 : vector<8x128xf32>
    %23 = vector.extract_strided_slice %16 {offsets = [0, 128], sizes = [8, 128], strides = [1, 1]} : vector<8x512xf32> to vector<8x128xf32>
    %24 = arith.negf %23 : vector<8x128xf32>
    %25 = math.exp %24 : vector<8x128xf32>
    %cst_14 = arith.constant 1.000000e+00 : f32
    %26 = vector.broadcast %cst_14 : f32 to vector<8x128xf32>
    %27 = arith.addf %26, %25 : vector<8x128xf32>
    %28 = arith.divf %26, %27 : vector<8x128xf32>
    %29 = vector.extract_strided_slice %16 {offsets = [0, 256], sizes = [8, 128], strides = [1, 1]} : vector<8x512xf32> to vector<8x128xf32>
    %30 = math.tanh %29 : vector<8x128xf32>
    %31 = vector.extract_strided_slice %16 {offsets = [0, 384], sizes = [8, 128], strides = [1, 1]} : vector<8x512xf32> to vector<8x128xf32>
    %32 = arith.negf %31 : vector<8x128xf32>
    %33 = math.exp %32 : vector<8x128xf32>
    %cst_15 = arith.constant 1.000000e+00 : f32
    %34 = vector.broadcast %cst_15 : f32 to vector<8x128xf32>
    %35 = arith.addf %34, %33 : vector<8x128xf32>
    %36 = arith.divf %34, %35 : vector<8x128xf32>
    %37 = arith.mulf %28, %9 : vector<8x128xf32>
    %38 = arith.mulf %22, %30 : vector<8x128xf32>
    %39 = arith.addf %37, %38 : vector<8x128xf32>
    %40 = math.tanh %39 : vector<8x128xf32>
    %41 = arith.mulf %36, %40 : vector<8x128xf32>
    %42 = arith.truncf %41 : vector<8x128xf32> to vector<8x128xbf16>
    %43 = arith.index_cast %11 : i32 to index
    %c0_16 = arith.constant 0 : index
    %44 = vector.load %arg4[%43, %c0_16] : memref<64x128xbf16, #tpu.memory_space<vmem>>, vector<8x128xbf16>
    tpu.vector_store %arg4[%43, %c0_16], %42 {strides = array<i32>} : memref<64x128xbf16, #tpu.memory_space<vmem>>, vector<8x128xbf16>,
    %c1_i32 = arith.constant 1 : i32
    %c8_i32_17 = arith.constant 8 : i32
    %45 = arith.muli %c1_i32, %c8_i32_17 : i32
    %46 = tpu.assume_multiple %45, 8 : i32
    %47 = arith.index_cast %46 : i32 to index
    %c0_18 = arith.constant 0 : index
    %48 = vector.load %arg5[%47, %c0_18] : memref<64x512xf32, #tpu.memory_space<vmem>>, vector<8x512xf32>
    %49 = arith.truncf %41 : vector<8x128xf32> to vector<8x128xbf16>
    %cst_19 = arith.constant dense<0.000000e+00> : vector<8x512xf32>
    %50 = tpu.matmul %49, %7, %cst_19 {dimension_numbers = #tpu.dot_dimension_numbers<[1], [0], [0], [1], [0, 0, 1, 1], [], []>} : vector<8x128xbf16>, vector<128x512xbf16>, vector<8x512xf32> -> vector<8x512xf32>
    %51 = arith.addf %48, %50 : vector<8x512xf32>
    %52 = vector.extract_strided_slice %51 {offsets = [0, 0], sizes = [8, 128], strides = [1, 1]} : vector<8x512xf32> to vector<8x128xf32>
    %53 = arith.negf %52 : vector<8x128xf32>
    %54 = math.exp %53 : vector<8x128xf32>
    %cst_20 = arith.constant 1.000000e+00 : f32
    %55 = vector.broadcast %cst_20 : f32 to vector<8x128xf32>
    %56 = arith.addf %55, %54 : vector<8x128xf32>
    %57 = arith.divf %55, %56 : vector<8x128xf32>
    %58 = vector.extract_strided_slice %51 {offsets = [0, 128], sizes = [8, 128], strides = [1, 1]} : vector<8x512xf32> to vector<8x128xf32>
    %59 = arith.negf %58 : vector<8x128xf32>
    %60 = math.exp %59 : vector<8x128xf32>
    %cst_21 = arith.constant 1.000000e+00 : f32
    %61 = vector.broadcast %cst_21 : f32 to vector<8x128xf32>
    %62 = arith.addf %61, %60 : vector<8x128xf32>
    %63 = arith.divf %61, %62 : vector<8x128xf32>
    %64 = vector.extract_strided_slice %51 {offsets = [0, 256], sizes = [8, 128], strides = [1, 1]} : vector<8x512xf32> to vector<8x128xf32>
    %65 = math.tanh %64 : vector<8x128xf32>
    %66 = vector.extract_strided_slice %51 {offsets = [0, 384], sizes = [8, 128], strides = [1, 1]} : vector<8x512xf32> to vector<8x128xf32>
    %67 = arith.negf %66 : vector<8x128xf32>
    %68 = math.exp %67 : vector<8x128xf32>
    %cst_22 = arith.constant 1.000000e+00 : f32
    %69 = vector.broadcast %cst_22 : f32 to vector<8x128xf32>
    %70 = arith.addf %69, %68 : vector<8x128xf32>
    %71 = arith.divf %69, %70 : vector<8x128xf32>
    %72 = arith.mulf %63, %39 : vector<8x128xf32>
    %73 = arith.mulf %57, %65 : vector<8x128xf32>
    %74 = arith.addf %72, %73 : vector<8x128xf32>
    %75 = math.tanh %74 : vector<8x128xf32>
    %76 = arith.mulf %71, %75 : vector<8x128xf32>
    %77 = arith.truncf %76 : vector<8x128xf32> to vector<8x128xbf16>
    %78 = arith.index_cast %46 : i32 to index
    %c0_23 = arith.constant 0 : index
    %79 = vector.load %arg4[%78, %c0_23] : memref<64x128xbf16, #tpu.memory_space<vmem>>, vector<8x128xbf16>
    tpu.vector_store %arg4[%78, %c0_23], %77 {strides = array<i32>} : memref<64x128xbf16, #tpu.memory_space<vmem>>, vector<8x128xbf16>,
    %c2_i32 = arith.constant 2 : i32
    %c8_i32_24 = arith.constant 8 : i32
    %80 = arith.muli %c2_i32, %c8_i32_24 : i32
    %81 = tpu.assume_multiple %80, 8 : i32
    %82 = arith.index_cast %81 : i32 to index
    %c0_25 = arith.constant 0 : index
    %83 = vector.load %arg5[%82, %c0_25] : memref<64x512xf32, #tpu.memory_space<vmem>>, vector<8x512xf32>
    %84 = arith.truncf %76 : vector<8x128xf32> to vector<8x128xbf16>
    %cst_26 = arith.constant dense<0.000000e+00> : vector<8x512xf32>
    %85 = tpu.matmul %84, %7, %cst_26 {dimension_numbers = #tpu.dot_dimension_numbers<[1], [0], [0], [1], [0, 0, 1, 1], [], []>} : vector<8x128xbf16>, vector<128x512xbf16>, vector<8x512xf32> -> vector<8x512xf32>
    %86 = arith.addf %83, %85 : vector<8x512xf32>
    %87 = vector.extract_strided_slice %86 {offsets = [0, 0], sizes = [8, 128], strides = [1, 1]} : vector<8x512xf32> to vector<8x128xf32>
    %88 = arith.negf %87 : vector<8x128xf32>
    %89 = math.exp %88 : vector<8x128xf32>
    %cst_27 = arith.constant 1.000000e+00 : f32
    %90 = vector.broadcast %cst_27 : f32 to vector<8x128xf32>
    %91 = arith.addf %90, %89 : vector<8x128xf32>
    %92 = arith.divf %90, %91 : vector<8x128xf32>
    %93 = vector.extract_strided_slice %86 {offsets = [0, 128], sizes = [8, 128], strides = [1, 1]} : vector<8x512xf32> to vector<8x128xf32>
    %94 = arith.negf %93 : vector<8x128xf32>
    %95 = math.exp %94 : vector<8x128xf32>
    %cst_28 = arith.constant 1.000000e+00 : f32
    %96 = vector.broadcast %cst_28 : f32 to vector<8x128xf32>
    %97 = arith.addf %96, %95 : vector<8x128xf32>
    %98 = arith.divf %96, %97 : vector<8x128xf32>
    %99 = vector.extract_strided_slice %86 {offsets = [0, 256], sizes = [8, 128], strides = [1, 1]} : vector<8x512xf32> to vector<8x128xf32>
    %100 = math.tanh %99 : vector<8x128xf32>
    %101 = vector.extract_strided_slice %86 {offsets = [0, 384], sizes = [8, 128], strides = [1, 1]} : vector<8x512xf32> to vector<8x128xf32>
    %102 = arith.negf %101 : vector<8x128xf32>
    %103 = math.exp %102 : vector<8x128xf32>
    %cst_29 = arith.constant 1.000000e+00 : f32
    %104 = vector.broadcast %cst_29 : f32 to vector<8x128xf32>
    %105 = arith.addf %104, %103 : vector<8x128xf32>
    %106 = arith.divf %104, %105 : vector<8x128xf32>
    %107 = arith.mulf %98, %74 : vector<8x128xf32>
    %108 = arith.mulf %92, %100 : vector<8x128xf32>
    %109 = arith.addf %107, %108 : vector<8x128xf32>
    %110 = math.tanh %109 : vector<8x128xf32>
    %111 = arith.mulf %106, %110 : vector<8x128xf32>
    %112 = arith.truncf %111 : vector<8x128xf32> to vector<8x128xbf16>
    %113 = arith.index_cast %81 : i32 to index
    %c0_30 = arith.constant 0 : index
    %114 = vector.load %arg4[%113, %c0_30] : memref<64x128xbf16, #tpu.memory_space<vmem>>, vector<8x128xbf16>
    tpu.vector_store %arg4[%113, %c0_30], %112 {strides = array<i32>} : memref<64x128xbf16, #tpu.memory_space<vmem>>, vector<8x128xbf16>,
    %c3_i32 = arith.constant 3 : i32
    %c8_i32_31 = arith.constant 8 : i32
    %115 = arith.muli %c3_i32, %c8_i32_31 : i32
    %116 = tpu.assume_multiple %115, 8 : i32
    %117 = arith.index_cast %116 : i32 to index
    %c0_32 = arith.constant 0 : index
    %118 = vector.load %arg5[%117, %c0_32] : memref<64x512xf32, #tpu.memory_space<vmem>>, vector<8x512xf32>
    %119 = arith.truncf %111 : vector<8x128xf32> to vector<8x128xbf16>
    %cst_33 = arith.constant dense<0.000000e+00> : vector<8x512xf32>
    %120 = tpu.matmul %119, %7, %cst_33 {dimension_numbers = #tpu.dot_dimension_numbers<[1], [0], [0], [1], [0, 0, 1, 1], [], []>} : vector<8x128xbf16>, vector<128x512xbf16>, vector<8x512xf32> -> vector<8x512xf32>
    %121 = arith.addf %118, %120 : vector<8x512xf32>
    %122 = vector.extract_strided_slice %121 {offsets = [0, 0], sizes = [8, 128], strides = [1, 1]} : vector<8x512xf32> to vector<8x128xf32>
    %123 = arith.negf %122 : vector<8x128xf32>
    %124 = math.exp %123 : vector<8x128xf32>
    %cst_34 = arith.constant 1.000000e+00 : f32
    %125 = vector.broadcast %cst_34 : f32 to vector<8x128xf32>
    %126 = arith.addf %125, %124 : vector<8x128xf32>
    %127 = arith.divf %125, %126 : vector<8x128xf32>
    %128 = vector.extract_strided_slice %121 {offsets = [0, 128], sizes = [8, 128], strides = [1, 1]} : vector<8x512xf32> to vector<8x128xf32>
    %129 = arith.negf %128 : vector<8x128xf32>
    %130 = math.exp %129 : vector<8x128xf32>
    %cst_35 = arith.constant 1.000000e+00 : f32
    %131 = vector.broadcast %cst_35 : f32 to vector<8x128xf32>
    %132 = arith.addf %131, %130 : vector<8x128xf32>
    %133 = arith.divf %131, %132 : vector<8x128xf32>
    %134 = vector.extract_strided_slice %121 {offsets = [0, 256], sizes = [8, 128], strides = [1, 1]} : vector<8x512xf32> to vector<8x128xf32>
    %135 = math.tanh %134 : vector<8x128xf32>
    %136 = vector.extract_strided_slice %121 {offsets = [0, 384], sizes = [8, 128], strides = [1, 1]} : vector<8x512xf32> to vector<8x128xf32>
    %137 = arith.negf %136 : vector<8x128xf32>
    %138 = math.exp %137 : vector<8x128xf32>
    %cst_36 = arith.constant 1.000000e+00 : f32
    %139 = vector.broadcast %cst_36 : f32 to vector<8x128xf32>
    %140 = arith.addf %139, %138 : vector<8x128xf32>
    %141 = arith.divf %139, %140 : vector<8x128xf32>
    %142 = arith.mulf %133, %109 : vector<8x128xf32>
    %143 = arith.mulf %127, %135 : vector<8x128xf32>
    %144 = arith.addf %142, %143 : vector<8x128xf32>
    %145 = math.tanh %144 : vector<8x128xf32>
    %146 = arith.mulf %141, %145 : vector<8x128xf32>
    %147 = arith.truncf %146 : vector<8x128xf32> to vector<8x128xbf16>
    %148 = arith.index_cast %116 : i32 to index
    %c0_37 = arith.constant 0 : index
    %149 = vector.load %arg4[%148, %c0_37] : memref<64x128xbf16, #tpu.memory_space<vmem>>, vector<8x128xbf16>
    tpu.vector_store %arg4[%148, %c0_37], %147 {strides = array<i32>} : memref<64x128xbf16, #tpu.memory_space<vmem>>, vector<8x128xbf16>,
    %c4_i32 = arith.constant 4 : i32
    %c8_i32_38 = arith.constant 8 : i32
    %150 = arith.muli %c4_i32, %c8_i32_38 : i32
    %151 = tpu.assume_multiple %150, 8 : i32
    %152 = arith.index_cast %151 : i32 to index
    %c0_39 = arith.constant 0 : index
    %153 = vector.load %arg5[%152, %c0_39] : memref<64x512xf32, #tpu.memory_space<vmem>>, vector<8x512xf32>
    %154 = arith.truncf %146 : vector<8x128xf32> to vector<8x128xbf16>
    %cst_40 = arith.constant dense<0.000000e+00> : vector<8x512xf32>
    %155 = tpu.matmul %154, %7, %cst_40 {dimension_numbers = #tpu.dot_dimension_numbers<[1], [0], [0], [1], [0, 0, 1, 1], [], []>} : vector<8x128xbf16>, vector<128x512xbf16>, vector<8x512xf32> -> vector<8x512xf32>
    %156 = arith.addf %153, %155 : vector<8x512xf32>
    %157 = vector.extract_strided_slice %156 {offsets = [0, 0], sizes = [8, 128], strides = [1, 1]} : vector<8x512xf32> to vector<8x128xf32>
    %158 = arith.negf %157 : vector<8x128xf32>
    %159 = math.exp %158 : vector<8x128xf32>
    %cst_41 = arith.constant 1.000000e+00 : f32
    %160 = vector.broadcast %cst_41 : f32 to vector<8x128xf32>
    %161 = arith.addf %160, %159 : vector<8x128xf32>
    %162 = arith.divf %160, %161 : vector<8x128xf32>
    %163 = vector.extract_strided_slice %156 {offsets = [0, 128], sizes = [8, 128], strides = [1, 1]} : vector<8x512xf32> to vector<8x128xf32>
    %164 = arith.negf %163 : vector<8x128xf32>
    %165 = math.exp %164 : vector<8x128xf32>
    %cst_42 = arith.constant 1.000000e+00 : f32
    %166 = vector.broadcast %cst_42 : f32 to vector<8x128xf32>
    %167 = arith.addf %166, %165 : vector<8x128xf32>
    %168 = arith.divf %166, %167 : vector<8x128xf32>
    %169 = vector.extract_strided_slice %156 {offsets = [0, 256], sizes = [8, 128], strides = [1, 1]} : vector<8x512xf32> to vector<8x128xf32>
    %170 = math.tanh %169 : vector<8x128xf32>
    %171 = vector.extract_strided_slice %156 {offsets = [0, 384], sizes = [8, 128], strides = [1, 1]} : vector<8x512xf32> to vector<8x128xf32>
    %172 = arith.negf %171 : vector<8x128xf32>
    %173 = math.exp %172 : vector<8x128xf32>
    %cst_43 = arith.constant 1.000000e+00 : f32
    %174 = vector.broadcast %cst_43 : f32 to vector<8x128xf32>
    %175 = arith.addf %174, %173 : vector<8x128xf32>
    %176 = arith.divf %174, %175 : vector<8x128xf32>
    %177 = arith.mulf %168, %144 : vector<8x128xf32>
    %178 = arith.mulf %162, %170 : vector<8x128xf32>
    %179 = arith.addf %177, %178 : vector<8x128xf32>
    %180 = math.tanh %179 : vector<8x128xf32>
    %181 = arith.mulf %176, %180 : vector<8x128xf32>
    %182 = arith.truncf %181 : vector<8x128xf32> to vector<8x128xbf16>
    %183 = arith.index_cast %151 : i32 to index
    %c0_44 = arith.constant 0 : index
    %184 = vector.load %arg4[%183, %c0_44] : memref<64x128xbf16, #tpu.memory_space<vmem>>, vector<8x128xbf16>
    tpu.vector_store %arg4[%183, %c0_44], %182 {strides = array<i32>} : memref<64x128xbf16, #tpu.memory_space<vmem>>, vector<8x128xbf16>,
    %c5_i32 = arith.constant 5 : i32
    %c8_i32_45 = arith.constant 8 : i32
    %185 = arith.muli %c5_i32, %c8_i32_45 : i32
    %186 = tpu.assume_multiple %185, 8 : i32
    %187 = arith.index_cast %186 : i32 to index
    %c0_46 = arith.constant 0 : index
    %188 = vector.load %arg5[%187, %c0_46] : memref<64x512xf32, #tpu.memory_space<vmem>>, vector<8x512xf32>
    %189 = arith.truncf %181 : vector<8x128xf32> to vector<8x128xbf16>
    %cst_47 = arith.constant dense<0.000000e+00> : vector<8x512xf32>
    %190 = tpu.matmul %189, %7, %cst_47 {dimension_numbers = #tpu.dot_dimension_numbers<[1], [0], [0], [1], [0, 0, 1, 1], [], []>} : vector<8x128xbf16>, vector<128x512xbf16>, vector<8x512xf32> -> vector<8x512xf32>
    %191 = arith.addf %188, %190 : vector<8x512xf32>
    %192 = vector.extract_strided_slice %191 {offsets = [0, 0], sizes = [8, 128], strides = [1, 1]} : vector<8x512xf32> to vector<8x128xf32>
    %193 = arith.negf %192 : vector<8x128xf32>
    %194 = math.exp %193 : vector<8x128xf32>
    %cst_48 = arith.constant 1.000000e+00 : f32
    %195 = vector.broadcast %cst_48 : f32 to vector<8x128xf32>
    %196 = arith.addf %195, %194 : vector<8x128xf32>
    %197 = arith.divf %195, %196 : vector<8x128xf32>
    %198 = vector.extract_strided_slice %191 {offsets = [0, 128], sizes = [8, 128], strides = [1, 1]} : vector<8x512xf32> to vector<8x128xf32>
    %199 = arith.negf %198 : vector<8x128xf32>
    %200 = math.exp %199 : vector<8x128xf32>
    %cst_49 = arith.constant 1.000000e+00 : f32
    %201 = vector.broadcast %cst_49 : f32 to vector<8x128xf32>
    %202 = arith.addf %201, %200 : vector<8x128xf32>
    %203 = arith.divf %201, %202 : vector<8x128xf32>
    %204 = vector.extract_strided_slice %191 {offsets = [0, 256], sizes = [8, 128], strides = [1, 1]} : vector<8x512xf32> to vector<8x128xf32>
    %205 = math.tanh %204 : vector<8x128xf32>
    %206 = vector.extract_strided_slice %191 {offsets = [0, 384], sizes = [8, 128], strides = [1, 1]} : vector<8x512xf32> to vector<8x128xf32>
    %207 = arith.negf %206 : vector<8x128xf32>
    %208 = math.exp %207 : vector<8x128xf32>
    %cst_50 = arith.constant 1.000000e+00 : f32
    %209 = vector.broadcast %cst_50 : f32 to vector<8x128xf32>
    %210 = arith.addf %209, %208 : vector<8x128xf32>
    %211 = arith.divf %209, %210 : vector<8x128xf32>
    %212 = arith.mulf %203, %179 : vector<8x128xf32>
    %213 = arith.mulf %197, %205 : vector<8x128xf32>
    %214 = arith.addf %212, %213 : vector<8x128xf32>
    %215 = math.tanh %214 : vector<8x128xf32>
    %216 = arith.mulf %211, %215 : vector<8x128xf32>
    %217 = arith.truncf %216 : vector<8x128xf32> to vector<8x128xbf16>
    %218 = arith.index_cast %186 : i32 to index
    %c0_51 = arith.constant 0 : index
    %219 = vector.load %arg4[%218, %c0_51] : memref<64x128xbf16, #tpu.memory_space<vmem>>, vector<8x128xbf16>
    tpu.vector_store %arg4[%218, %c0_51], %217 {strides = array<i32>} : memref<64x128xbf16, #tpu.memory_space<vmem>>, vector<8x128xbf16>,
    %c6_i32 = arith.constant 6 : i32
    %c8_i32_52 = arith.constant 8 : i32
    %220 = arith.muli %c6_i32, %c8_i32_52 : i32
    %221 = tpu.assume_multiple %220, 8 : i32
    %222 = arith.index_cast %221 : i32 to index
    %c0_53 = arith.constant 0 : index
    %223 = vector.load %arg5[%222, %c0_53] : memref<64x512xf32, #tpu.memory_space<vmem>>, vector<8x512xf32>
    %224 = arith.truncf %216 : vector<8x128xf32> to vector<8x128xbf16>
    %cst_54 = arith.constant dense<0.000000e+00> : vector<8x512xf32>
    %225 = tpu.matmul %224, %7, %cst_54 {dimension_numbers = #tpu.dot_dimension_numbers<[1], [0], [0], [1], [0, 0, 1, 1], [], []>} : vector<8x128xbf16>, vector<128x512xbf16>, vector<8x512xf32> -> vector<8x512xf32>
    %226 = arith.addf %223, %225 : vector<8x512xf32>
    %227 = vector.extract_strided_slice %226 {offsets = [0, 0], sizes = [8, 128], strides = [1, 1]} : vector<8x512xf32> to vector<8x128xf32>
    %228 = arith.negf %227 : vector<8x128xf32>
    %229 = math.exp %228 : vector<8x128xf32>
    %cst_55 = arith.constant 1.000000e+00 : f32
    %230 = vector.broadcast %cst_55 : f32 to vector<8x128xf32>
    %231 = arith.addf %230, %229 : vector<8x128xf32>
    %232 = arith.divf %230, %231 : vector<8x128xf32>
    %233 = vector.extract_strided_slice %226 {offsets = [0, 128], sizes = [8, 128], strides = [1, 1]} : vector<8x512xf32> to vector<8x128xf32>
    %234 = arith.negf %233 : vector<8x128xf32>
    %235 = math.exp %234 : vector<8x128xf32>
    %cst_56 = arith.constant 1.000000e+00 : f32
    %236 = vector.broadcast %cst_56 : f32 to vector<8x128xf32>
    %237 = arith.addf %236, %235 : vector<8x128xf32>
    %238 = arith.divf %236, %237 : vector<8x128xf32>
    %239 = vector.extract_strided_slice %226 {offsets = [0, 256], sizes = [8, 128], strides = [1, 1]} : vector<8x512xf32> to vector<8x128xf32>
    %240 = math.tanh %239 : vector<8x128xf32>
    %241 = vector.extract_strided_slice %226 {offsets = [0, 384], sizes = [8, 128], strides = [1, 1]} : vector<8x512xf32> to vector<8x128xf32>
    %242 = arith.negf %241 : vector<8x128xf32>
    %243 = math.exp %242 : vector<8x128xf32>
    %cst_57 = arith.constant 1.000000e+00 : f32
    %244 = vector.broadcast %cst_57 : f32 to vector<8x128xf32>
    %245 = arith.addf %244, %243 : vector<8x128xf32>
    %246 = arith.divf %244, %245 : vector<8x128xf32>
    %247 = arith.mulf %238, %214 : vector<8x128xf32>
    %248 = arith.mulf %232, %240 : vector<8x128xf32>
    %249 = arith.addf %247, %248 : vector<8x128xf32>
    %250 = math.tanh %249 : vector<8x128xf32>
    %251 = arith.mulf %246, %250 : vector<8x128xf32>
    %252 = arith.truncf %251 : vector<8x128xf32> to vector<8x128xbf16>
    %253 = arith.index_cast %221 : i32 to index
    %c0_58 = arith.constant 0 : index
    %254 = vector.load %arg4[%253, %c0_58] : memref<64x128xbf16, #tpu.memory_space<vmem>>, vector<8x128xbf16>
    tpu.vector_store %arg4[%253, %c0_58], %252 {strides = array<i32>} : memref<64x128xbf16, #tpu.memory_space<vmem>>, vector<8x128xbf16>,
    %c7_i32 = arith.constant 7 : i32
    %c8_i32_59 = arith.constant 8 : i32
    %255 = arith.muli %c7_i32, %c8_i32_59 : i32
    %256 = tpu.assume_multiple %255, 8 : i32
    %257 = arith.index_cast %256 : i32 to index
    %c0_60 = arith.constant 0 : index
    %258 = vector.load %arg5[%257, %c0_60] : memref<64x512xf32, #tpu.memory_space<vmem>>, vector<8x512xf32>
    %259 = arith.truncf %251 : vector<8x128xf32> to vector<8x128xbf16>
    %cst_61 = arith.constant dense<0.000000e+00> : vector<8x512xf32>
    %260 = tpu.matmul %259, %7, %cst_61 {dimension_numbers = #tpu.dot_dimension_numbers<[1], [0], [0], [1], [0, 0, 1, 1], [], []>} : vector<8x128xbf16>, vector<128x512xbf16>, vector<8x512xf32> -> vector<8x512xf32>
    %261 = arith.addf %258, %260 : vector<8x512xf32>
    %262 = vector.extract_strided_slice %261 {offsets = [0, 0], sizes = [8, 128], strides = [1, 1]} : vector<8x512xf32> to vector<8x128xf32>
    %263 = arith.negf %262 : vector<8x128xf32>
    %264 = math.exp %263 : vector<8x128xf32>
    %cst_62 = arith.constant 1.000000e+00 : f32
    %265 = vector.broadcast %cst_62 : f32 to vector<8x128xf32>
    %266 = arith.addf %265, %264 : vector<8x128xf32>
    %267 = arith.divf %265, %266 : vector<8x128xf32>
    %268 = vector.extract_strided_slice %261 {offsets = [0, 128], sizes = [8, 128], strides = [1, 1]} : vector<8x512xf32> to vector<8x128xf32>
    %269 = arith.negf %268 : vector<8x128xf32>
    %270 = math.exp %269 : vector<8x128xf32>
    %cst_63 = arith.constant 1.000000e+00 : f32
    %271 = vector.broadcast %cst_63 : f32 to vector<8x128xf32>
    %272 = arith.addf %271, %270 : vector<8x128xf32>
    %273 = arith.divf %271, %272 : vector<8x128xf32>
    %274 = vector.extract_strided_slice %261 {offsets = [0, 256], sizes = [8, 128], strides = [1, 1]} : vector<8x512xf32> to vector<8x128xf32>
    %275 = math.tanh %274 : vector<8x128xf32>
    %276 = vector.extract_strided_slice %261 {offsets = [0, 384], sizes = [8, 128], strides = [1, 1]} : vector<8x512xf32> to vector<8x128xf32>
    %277 = arith.negf %276 : vector<8x128xf32>
    %278 = math.exp %277 : vector<8x128xf32>
    %cst_64 = arith.constant 1.000000e+00 : f32
    %279 = vector.broadcast %cst_64 : f32 to vector<8x128xf32>
    %280 = arith.addf %279, %278 : vector<8x128xf32>
    %281 = arith.divf %279, %280 : vector<8x128xf32>
    %282 = arith.mulf %273, %249 : vector<8x128xf32>
    %283 = arith.mulf %267, %275 : vector<8x128xf32>
    %284 = arith.addf %282, %283 : vector<8x128xf32>
    %285 = math.tanh %284 : vector<8x128xf32>
    %286 = arith.mulf %281, %285 : vector<8x128xf32>
    %287 = arith.truncf %286 : vector<8x128xf32> to vector<8x128xbf16>
    %288 = arith.index_cast %256 : i32 to index
    %c0_65 = arith.constant 0 : index
    %289 = vector.load %arg4[%288, %c0_65] : memref<64x128xbf16, #tpu.memory_space<vmem>>, vector<8x128xbf16>
    tpu.vector_store %arg4[%288, %c0_65], %287 {strides = array<i32>} : memref<64x128xbf16, #tpu.memory_space<vmem>>, vector<8x128xbf16>,
    %c8_i32_66 = arith.constant 8 : i32
    return
  }
}

</mosaic_0001>

<llo_original>
// kernel: tpu_custom_call.1
$region0: #{tpu_custom_call.1}
  #allocation0 [shape = 'u32[]', space=smem, size = 0x4, offset = 0x4, fixed_abs, tag = 'smem constant byte address 0x4 - core index']
  #allocation1 [shape = 'u32[144,128]{1,0:T(1,128)}', space=vmem, size = 0x12000, scoped, tag = 'internal scratch']
  #allocation2 [shape = 'f32[64,512]{1,0:T(8,128)}', space=vmem, size = 0x20000, scoped, tag = 'scratch operand']
  %s0 = inlined_call_operand.hbm [shape: bf16[64,128], index: 0, kind: input, shape index: {}]
  %s1 = inlined_call_operand.hbm [shape: bf16[128,512], index: 1, kind: input, shape index: {}]
  %s2 = inlined_call_operand.hbm [shape: bf16[128,512], index: 2, kind: input, shape index: {}]
  %s3 = inlined_call_operand.vmem [shape: f32[1,512], index: 3, kind: input, shape index: {}]
  %s4 = inlined_call_operand.hbm [shape: bf16[64,128], index: 4, kind: output, shape index: {}]
  %s5 = sld [smem:[#allocation0]]
  $region38: #{tpu_custom_call.1} parent=0
    _
  %s7 = ssub.s32 1, %s5
  %s8 = scalar_select 0, %s7, %s5
  $region1: #{tpu_custom_call.1} parent=0
    #allocation3 [shape = 'u8[16384]{0}', space=vmem, size = 0x4000, scoped, tag = 'input window, operand 0, single buffered']
    #allocation4 [shape = 's32[1]{0}', space=sflag, size = 0x4, scoped, tag = 'scoped memory for tpu_custom_call.1']
    #allocation5 [shape = 's32[1]{0}', space=sflag, size = 0x4, scoped, tag = 'scoped memory for tpu_custom_call.1']
    #allocation6 [shape = 'u8[131072]{0}', space=vmem, size = 0x20000, scoped, tag = 'input window, operand 1, single buffered']
    #allocation7 [shape = 's32[1]{0}', space=sflag, size = 0x4, scoped, tag = 'scoped memory for tpu_custom_call.1']
    #allocation8 [shape = 'u8[131072]{0}', space=vmem, size = 0x20000, scoped, tag = 'input window, operand 2, single buffered']
    #allocation9 [shape = 'u8[16384]{0}', space=vmem, size = 0x4000, scoped, tag = 'output window, operand 0, single buffered']
    %9 = vsyncpa [#allocation4], 0
    %10 = vsyncpa [#allocation7], 0
    %11 = vsyncpa [#allocation5], 0
    // Predicated region
    $region2: #{tpu_custom_call.1} parent=1 // pred_check
      _
    $region3: #{tpu_custom_call.1} parent=1 // pred_check_branch
      %13 = sbr.rel (0) target = $region5
    $region4: #{tpu_custom_call.1} parent=1 // pred_region
      %s15 = ssub.s32 512, 512
      %16 = vsyncadd [#allocation4], %s15
      %s17 = sshll.u32 [#allocation3], 4
      %s18 = int_to_ptr.vmem [resolvable:$true] %s17
      %23 = dma.hbm_to_vmem [thread:$0]  %s0, 512, %s18, [#allocation4], 64, 64, 4
    $region5: #{tpu_custom_call.1} parent=1 // pred_fallthru
      _
    // Predicated region
    $region6: #{tpu_custom_call.1} parent=1 // pred_check
      _
    $region7: #{tpu_custom_call.1} parent=1 // pred_check_branch
      %25 = sbr.rel (0) target = $region9
    $region8: #{tpu_custom_call.1} parent=1 // pred_region
      %s27 = ssub.s32 4096, 4096
      %28 = vsyncadd [#allocation7], %s27
      %s29 = sshll.u32 [#allocation6], 4
      %s30 = int_to_ptr.vmem [resolvable:$true] %s29
      %35 = dma.hbm_to_vmem [thread:$0]  %s1, 4096, %s30, [#allocation7], 256, 256, 16
    $region9: #{tpu_custom_call.1} parent=1 // pred_fallthru
      _
    // Predicated region
    $region10: #{tpu_custom_call.1} parent=1 // pred_check
      _
    $region11: #{tpu_custom_call.1} parent=1 // pred_check_branch
      %37 = sbr.rel (0) target = $region13
    $region12: #{tpu_custom_call.1} parent=1 // pred_region
      %s39 = ssub.s32 4096, 4096
      %40 = vsyncadd [#allocation7], %s39
      %s41 = sshll.u32 [#allocation8], 4
      %s42 = int_to_ptr.vmem [resolvable:$true] %s41
      %47 = dma.hbm_to_vmem [thread:$0]  %s2, 4096, %s42, [#allocation7], 256, 256, 16
    $region13: #{tpu_custom_call.1} parent=1 // pred_fallthru
      _
    // Predicated region
    $region14: #{tpu_custom_call.1} parent=1 // pred_check
      _
    $region15: #{tpu_custom_call.1} parent=1 // pred_check_branch
      %49 = sbr.rel (0) target = $region17
    $region16: #{tpu_custom_call.1} parent=1 // pred_region
      _
    $region17: #{tpu_custom_call.1} parent=1 // pred_fallthru
      _
    // Predicated region
    $region18: #{tpu_custom_call.1} parent=1 // pred_check
      _
    $region19: #{tpu_custom_call.1} parent=1 // pred_check_branch
      %51 = sbr.rel (0) target = $region21
    $region20: #{tpu_custom_call.1} parent=1 // pred_region
      %52 = dma.done [#allocation4], 512
    $region21: #{tpu_custom_call.1} parent=1 // pred_fallthru
      _
    // Predicated region
    $region22: #{tpu_custom_call.1} parent=1 // pred_check
      _
    $region23: #{tpu_custom_call.1} parent=1 // pred_check_branch
      %54 = sbr.rel (0) target = $region25
    $region24: #{tpu_custom_call.1} parent=1 // pred_region
      %55 = dma.done [#allocation7], 4096
    $region25: #{tpu_custom_call.1} parent=1 // pred_fallthru
      _
    // Predicated region
    $region26: #{tpu_custom_call.1} parent=1 // pred_check
      _
    $region27: #{tpu_custom_call.1} parent=1 // pred_check_branch
      %57 = sbr.rel (0) target = $region29
    $region28: #{tpu_custom_call.1} parent=1 // pred_region
      %58 = dma.done [#allocation7], 4096
    $region29: #{tpu_custom_call.1} parent=1 // pred_fallthru
      _
    %v60 = vld [vmem:[#allocation3] sm:$0xf]
    %v61 = vld [vmem:[#allocation3 + $0x4] sm:$0xf]
    %v62 = vld [vmem:[#allocation3 + $0x8] sm:$0xf]
    %v63 = vld [vmem:[#allocation3 + $0xc] sm:$0xf]
    %v64 = vld [vmem:[#allocation3 + $0x10] sm:$0xf]
    %v65 = vld [vmem:[#allocation3 + $0x14] sm:$0xf]
    %v66 = vld [vmem:[#allocation3 + $0x18] sm:$0xf]
    %v67 = vld [vmem:[#allocation3 + $0x1c] sm:$0xf]
    %v68 = vld [vmem:[#allocation6] sm:$0xff]
    %v69 = vld [vmem:[#allocation6 + $0x8] sm:$0xff]
    %v70 = vld [vmem:[#allocation6 + $0x10] sm:$0xff]
    %v71 = vld [vmem:[#allocation6 + $0x18] sm:$0xff]
    %v72 = vld [vmem:[#allocation6 + $0x20] sm:$0xff]
    %v73 = vld [vmem:[#allocation6 + $0x28] sm:$0xff]
    %v74 = vld [vmem:[#allocation6 + $0x30] sm:$0xff]
    %v75 = vld [vmem:[#allocation6 + $0x38] sm:$0xff]
    %v76 = vld [vmem:[#allocation6 + $0x40] sm:$0xff]
    %v77 = vld [vmem:[#allocation6 + $0x48] sm:$0xff]
    %v78 = vld [vmem:[#allocation6 + $0x50] sm:$0xff]
    %v79 = vld [vmem:[#allocation6 + $0x58] sm:$0xff]
    %v80 = vld [vmem:[#allocation6 + $0x60] sm:$0xff]
    %v81 = vld [vmem:[#allocation6 + $0x68] sm:$0xff]
    %v82 = vld [vmem:[#allocation6 + $0x70] sm:$0xff]
    %v83 = vld [vmem:[#allocation6 + $0x78] sm:$0xff]
    %v84 = vld [vmem:[#allocation6 + $0x80] sm:$0xff]
    %v85 = vld [vmem:[#allocation6 + $0x88] sm:$0xff]
    %v86 = vld [vmem:[#allocation6 + $0x90] sm:$0xff]
    %v87 = vld [vmem:[#allocation6 + $0x98] sm:$0xff]
    %v88 = vld [vmem:[#allocation6 + $0xa0] sm:$0xff]
    %v89 = vld [vmem:[#allocation6 + $0xa8] sm:$0xff]
    %v90 = vld [vmem:[#allocation6 + $0xb0] sm:$0xff]
    %v91 = vld [vmem:[#allocation6 + $0xb8] sm:$0xff]
    %v92 = vld [vmem:[#allocation6 + $0xc0] sm:$0xff]
    %v93 = vld [vmem:[#allocation6 + $0xc8] sm:$0xff]
    %v94 = vld [vmem:[#allocation6 + $0xd0] sm:$0xff]
    %v95 = vld [vmem:[#allocation6 + $0xd8] sm:$0xff]
    %v96 = vld [vmem:[#allocation6 + $0xe0] sm:$0xff]
    %v97 = vld [vmem:[#allocation6 + $0xe8] sm:$0xff]
    %v98 = vld [vmem:[#allocation6 + $0xf0] sm:$0xff]
    %v99 = vld [vmem:[#allocation6 + $0xf8] sm:$0xff]
    %v100 = vld [vmem:[%s3] sm:$0xf]
    %v102 = vlaneseq
    %v103 = vshrl.u32 %v102, 7
    %v104 = vsub.s32 0, %v103
    %v105 = vrot.slane %v100, %v104
    %v106 = vlaneseq
    %v107 = vshrl.u32 %v106, 7
    %v108 = vsub.s32 1, %v107
    %v109 = vrot.slane %v100, %v108
    %v110 = vlaneseq
    %v111 = vshrl.u32 %v110, 7
    %v112 = vsub.s32 2, %v111
    %v113 = vrot.slane %v100, %v112
    %v114 = vlaneseq
    %v115 = vshrl.u32 %v114, 7
    %v116 = vsub.s32 3, %v115
    %v117 = vrot.slane %v100, %v116
    %v130 = vunpack.c.l.b16 %v60
    %v131 = vunpack.c.l.b16 %v61
    %v132 = vunpack.c.l.b16 %v62
    %v133 = vunpack.c.l.b16 %v63
    %v134 = vunpack.c.l.b16 %v64
    %v135 = vunpack.c.l.b16 %v65
    %v136 = vunpack.c.l.b16 %v66
    %v137 = vunpack.c.l.b16 %v67
    %v138 = vpack.c.b16 %v131, %v130
    %v139 = vpack.c.b16 %v133, %v132
    %v140 = vpack.c.b16 %v135, %v134
    %v141 = vpack.c.b16 %v137, %v136
    %v178 = vunpack.c.l.b16 %v68
    %v179 = vunpack.c.h.b16 %v68
    %v180 = vunpack.c.l.b16 %v69
    %v181 = vunpack.c.h.b16 %v69
    %v182 = vunpack.c.l.b16 %v70
    %v183 = vunpack.c.h.b16 %v70
    %v184 = vunpack.c.l.b16 %v71
    %v185 = vunpack.c.h.b16 %v71
    %v186 = vunpack.c.l.b16 %v72
    %v187 = vunpack.c.h.b16 %v72
    %v188 = vunpack.c.l.b16 %v73
    %v189 = vunpack.c.h.b16 %v73
    %v190 = vunpack.c.l.b16 %v74
    %v191 = vunpack.c.h.b16 %v74
    %v192 = vunpack.c.l.b16 %v75
    %v193 = vunpack.c.h.b16 %v75
    %v194 = vunpack.c.l.b16 %v76
    %v195 = vunpack.c.h.b16 %v76
    %v196 = vunpack.c.l.b16 %v77
    %v197 = vunpack.c.h.b16 %v77
    %v198 = vunpack.c.l.b16 %v78
    %v199 = vunpack.c.h.b16 %v78
    %v200 = vunpack.c.l.b16 %v79
    %v201 = vunpack.c.h.b16 %v79
    %v202 = vunpack.c.l.b16 %v80
    %v203 = vunpack.c.h.b16 %v80
    %v204 = vunpack.c.l.b16 %v81
    %v205 = vunpack.c.h.b16 %v81
    %v206 = vunpack.c.l.b16 %v82
    %v207 = vunpack.c.h.b16 %v82
    %v208 = vunpack.c.l.b16 %v83
    %v209 = vunpack.c.h.b16 %v83
    %v210 = vunpack.c.l.b16 %v84
    %v211 = vunpack.c.h.b16 %v84
    %v212 = vunpack.c.l.b16 %v85
    %v213 = vunpack.c.h.b16 %v85
    %v214 = vunpack.c.l.b16 %v86
    %v215 = vunpack.c.h.b16 %v86
    %v216 = vunpack.c.l.b16 %v87
    %v217 = vunpack.c.h.b16 %v87
    %v218 = vunpack.c.l.b16 %v88
    %v219 = vunpack.c.h.b16 %v88
    %v220 = vunpack.c.l.b16 %v89
    %v221 = vunpack.c.h.b16 %v89
    %v222 = vunpack.c.l.b16 %v90
    %v223 = vunpack.c.h.b16 %v90
    %v224 = vunpack.c.l.b16 %v91
    %v225 = vunpack.c.h.b16 %v91
    %v226 = vunpack.c.l.b16 %v92
    %v227 = vunpack.c.h.b16 %v92
    %v228 = vunpack.c.l.b16 %v93
    %v229 = vunpack.c.h.b16 %v93
    %v230 = vunpack.c.l.b16 %v94
    %v231 = vunpack.c.h.b16 %v94
    %v232 = vunpack.c.l.b16 %v95
    %v233 = vunpack.c.h.b16 %v95
    %v234 = vunpack.c.l.b16 %v96
    %v235 = vunpack.c.h.b16 %v96
    %v236 = vunpack.c.l.b16 %v97
    %v237 = vunpack.c.h.b16 %v97
    %v238 = vunpack.c.l.b16 %v98
    %v239 = vunpack.c.h.b16 %v98
    %v240 = vunpack.c.l.b16 %v99
    %v241 = vunpack.c.h.b16 %v99
    %v242 = vpack.c.b16 %v182, %v178
    %v243 = vpack.c.b16 %v183, %v179
    %v244 = vpack.c.b16 %v184, %v180
    %v245 = vpack.c.b16 %v185, %v181
    %v246 = vpack.c.b16 %v190, %v186
    %v247 = vpack.c.b16 %v191, %v187
    %v248 = vpack.c.b16 %v192, %v188
    %v249 = vpack.c.b16 %v193, %v189
    %v250 = vpack.c.b16 %v198, %v194
    %v251 = vpack.c.b16 %v199, %v195
    %v252 = vpack.c.b16 %v200, %v196
    %v253 = vpack.c.b16 %v201, %v197
    %v254 = vpack.c.b16 %v206, %v202
    %v255 = vpack.c.b16 %v207, %v203
    %v256 = vpack.c.b16 %v208, %v204
    %v257 = vpack.c.b16 %v209, %v205
    %v258 = vpack.c.b16 %v214, %v210
    %v259 = vpack.c.b16 %v215, %v211
    %v260 = vpack.c.b16 %v216, %v212
    %v261 = vpack.c.b16 %v217, %v213
    %v262 = vpack.c.b16 %v222, %v218
    %v263 = vpack.c.b16 %v223, %v219
    %v264 = vpack.c.b16 %v224, %v220
    %v265 = vpack.c.b16 %v225, %v221
    %v266 = vpack.c.b16 %v230, %v226
    %v267 = vpack.c.b16 %v231, %v227
    %v268 = vpack.c.b16 %v232, %v228
    %v269 = vpack.c.b16 %v233, %v229
    %v270 = vpack.c.b16 %v238, %v234
    %v271 = vpack.c.b16 %v239, %v235
    %v272 = vpack.c.b16 %v240, %v236
    %v273 = vpack.c.b16 %v241, %v237
    %306 = vmatprep.subr.bf16.mxu0 %v271
    %307 = vmatpush1.bf16.msra.mxu0 %v270
    %308 = vmatprep.subr.bf16.mxu0 %v267
    %309 = vmatpush1.bf16.msra.mxu0 %v266
    %310 = vmatprep.subr.bf16.mxu0 %v263
    %311 = vmatpush1.bf16.msra.mxu0 %v262
    %312 = vmatprep.subr.bf16.mxu0 %v259
    %313 = vmatpush1.bf16.msra.mxu0 %v258
    %314 = vmatprep.subr.bf16.mxu0 %v255
    %315 = vmatpush1.bf16.msra.mxu0 %v254
    %316 = vmatprep.subr.bf16.mxu0 %v251
    %317 = vmatpush1.bf16.msra.mxu0 %v250
    %318 = vmatprep.subr.bf16.mxu0 %v247
    %319 = vmatpush1.bf16.msra.mxu0 %v246
    %320 = vmatprep.subr.bf16.mxu0 %v243
    %321 = vmatpush1.bf16.msra.mxu0 %v242
    %322 = vmatprep.subr.bf16.mxu0 0
    %323 = vmatpush2.bf16.msra.mxu0 0
    %324 = vmatprep.subr.bf16.mxu0 0
    %325 = vmatpush2.bf16.msra.mxu0 0
    %326 = vmatprep.subr.bf16.mxu0 0
    %327 = vmatpush2.bf16.msra.mxu0 0
    %328 = vmatprep.subr.bf16.mxu0 0
    %329 = vmatpush2.bf16.msra.mxu0 0
    %330 = vmatprep.subr.bf16.mxu0 0
    %331 = vmatpush2.bf16.msra.mxu0 0
    %332 = vmatprep.subr.bf16.mxu0 0
    %333 = vmatpush2.bf16.msra.mxu0 0
    %334 = vmatprep.subr.bf16.mxu0 0
    %335 = vmatpush2.bf16.msra.mxu0 0
    %336 = vmatprep.subr.bf16.mxu0 0
    %337 = vmatpush2.bf16.msra.mxu0 0
    %338 = vmatprep.mubr.bf16.mxu0 0
    %339 = vmatmul.mubr.bf16.gmra.mxu0 %v138
    %v340 = vpop.f32.mrf.mxu0
    %v341 = vadd.f32 %v105, %v340
    %v342 = vpop.f32.mrf.mxu0
    %v343 = vadd.f32 %v109, %v342
    %v344 = vpop.f32.mrf.mxu0
    %v345 = vadd.f32 %v105, %v344
    %v346 = vpop.f32.mrf.mxu0
    %v347 = vadd.f32 %v109, %v346
    %348 = vmatprep.mubr.bf16.mxu0 0
    %349 = vmatmul.mubr.bf16.gmra.mxu0 %v139
    %v350 = vpop.f32.mrf.mxu0
    %v351 = vadd.f32 %v105, %v350
    %v352 = vpop.f32.mrf.mxu0
    %v353 = vadd.f32 %v109, %v352
    %v354 = vpop.f32.mrf.mxu0
    %v355 = vadd.f32 %v105, %v354
    %v356 = vpop.f32.mrf.mxu0
    %v357 = vadd.f32 %v109, %v356
    %358 = vmatprep.mubr.bf16.mxu0 0
    %359 = vmatmul.mubr.bf16.gmra.mxu0 %v140
    %v360 = vpop.f32.mrf.mxu0
    %v361 = vadd.f32 %v105, %v360
    %v362 = vpop.f32.mrf.mxu0
    %v363 = vadd.f32 %v109, %v362
    %v364 = vpop.f32.mrf.mxu0
    %v365 = vadd.f32 %v105, %v364
    %v366 = vpop.f32.mrf.mxu0
    %v367 = vadd.f32 %v109, %v366
    %368 = vmatprep.mubr.bf16.mxu0 0
    %369 = vmatmul.mubr.bf16.gmra.mxu0 %v141
    %v370 = vpop.f32.mrf.mxu0
    %v371 = vadd.f32 %v105, %v370
    %v372 = vpop.f32.mrf.mxu0
    %v373 = vadd.f32 %v109, %v372
    %v374 = vpop.f32.mrf.mxu0
    %v375 = vadd.f32 %v105, %v374
    %v376 = vpop.f32.mrf.mxu0
    %v377 = vadd.f32 %v109, %v376
    %378 = vdwg.mxu0
    %379 = vmatprep.subr.bf16.mxu0 %v273
    %380 = vmatpush1.bf16.msra.mxu0 %v272
    %381 = vmatprep.subr.bf16.mxu0 %v269
    %382 = vmatpush1.bf16.msra.mxu0 %v268
    %383 = vmatprep.subr.bf16.mxu0 %v265
    %384 = vmatpush1.bf16.msra.mxu0 %v264
    %385 = vmatprep.subr.bf16.mxu0 %v261
    %386 = vmatpush1.bf16.msra.mxu0 %v260
    %387 = vmatprep.subr.bf16.mxu0 %v257
    %388 = vmatpush1.bf16.msra.mxu0 %v256
    %389 = vmatprep.subr.bf16.mxu0 %v253
    %390 = vmatpush1.bf16.msra.mxu0 %v252
    %391 = vmatprep.subr.bf16.mxu0 %v249
    %392 = vmatpush1.bf16.msra.mxu0 %v248
    %393 = vmatprep.subr.bf16.mxu0 %v245
    %394 = vmatpush1.bf16.msra.mxu0 %v244
    %395 = vmatprep.subr.bf16.mxu0 0
    %396 = vmatpush2.bf16.msra.mxu0 0
    %397 = vmatprep.subr.bf16.mxu0 0
    %398 = vmatpush2.bf16.msra.mxu0 0
    %399 = vmatprep.subr.bf16.mxu0 0
    %400 = vmatpush2.bf16.msra.mxu0 0
    %401 = vmatprep.subr.bf16.mxu0 0
    %402 = vmatpush2.bf16.msra.mxu0 0
    %403 = vmatprep.subr.bf16.mxu0 0
    %404 = vmatpush2.bf16.msra.mxu0 0
    %405 = vmatprep.subr.bf16.mxu0 0
    %406 = vmatpush2.bf16.msra.mxu0 0
    %407 = vmatprep.subr.bf16.mxu0 0
    %408 = vmatpush2.bf16.msra.mxu0 0
    %409 = vmatprep.subr.bf16.mxu0 0
    %410 = vmatpush2.bf16.msra.mxu0 0
    %411 = vmatprep.mubr.bf16.mxu0 0
    %412 = vmatmul.mubr.bf16.gmra.mxu0 %v138
    %v413 = vpop.f32.mrf.mxu0
    %v414 = vadd.f32 %v113, %v413
    %v415 = vpop.f32.mrf.mxu0
    %v416 = vadd.f32 %v117, %v415
    %v417 = vpop.f32.mrf.mxu0
    %v418 = vadd.f32 %v113, %v417
    %v419 = vpop.f32.mrf.mxu0
    %v420 = vadd.f32 %v117, %v419
    %421 = vmatprep.mubr.bf16.mxu0 0
    %422 = vmatmul.mubr.bf16.gmra.mxu0 %v139
    %v423 = vpop.f32.mrf.mxu0
    %v424 = vadd.f32 %v113, %v423
    %v425 = vpop.f32.mrf.mxu0
    %v426 = vadd.f32 %v117, %v425
    %v427 = vpop.f32.mrf.mxu0
    %v428 = vadd.f32 %v113, %v427
    %v429 = vpop.f32.mrf.mxu0
    %v430 = vadd.f32 %v117, %v429
    %431 = vmatprep.mubr.bf16.mxu0 0
    %432 = vmatmul.mubr.bf16.gmra.mxu0 %v140
    %v433 = vpop.f32.mrf.mxu0
    %v434 = vadd.f32 %v113, %v433
    %v435 = vpop.f32.mrf.mxu0
    %v436 = vadd.f32 %v117, %v435
    %v437 = vpop.f32.mrf.mxu0
    %v438 = vadd.f32 %v113, %v437
    %v439 = vpop.f32.mrf.mxu0
    %v440 = vadd.f32 %v117, %v439
    %441 = vmatprep.mubr.bf16.mxu0 0
    %442 = vmatmul.mubr.bf16.gmra.mxu0 %v141
    %v443 = vpop.f32.mrf.mxu0
    %v444 = vadd.f32 %v113, %v443
    %v445 = vpop.f32.mrf.mxu0
    %v446 = vadd.f32 %v117, %v445
    %v447 = vpop.f32.mrf.mxu0
    %v448 = vadd.f32 %v113, %v447
    %v449 = vpop.f32.mrf.mxu0
    %v450 = vadd.f32 %v117, %v449
    %451 = vdwg.mxu0
    %452 = vst [vmem:[#allocation2] sm:$0xff] %v341
    %453 = vst [vmem:[#allocation2 + $0x8] sm:$0xff] %v343
    %454 = vst [vmem:[#allocation2 + $0x10] sm:$0xff] %v414
    %455 = vst [vmem:[#allocation2 + $0x18] sm:$0xff] %v416
    %456 = vst [vmem:[#allocation2 + $0x20] sm:$0xff] %v345
    %457 = vst [vmem:[#allocation2 + $0x28] sm:$0xff] %v347
    %458 = vst [vmem:[#allocation2 + $0x30] sm:$0xff] %v418
    %459 = vst [vmem:[#allocation2 + $0x38] sm:$0xff] %v420
    %460 = vst [vmem:[#allocation2 + $0x40] sm:$0xff] %v351
    %461 = vst [vmem:[#allocation2 + $0x48] sm:$0xff] %v353
    %462 = vst [vmem:[#allocation2 + $0x50] sm:$0xff] %v424
    %463 = vst [vmem:[#allocation2 + $0x58] sm:$0xff] %v426
    %464 = vst [vmem:[#allocation2 + $0x60] sm:$0xff] %v355
    %465 = vst [vmem:[#allocation2 + $0x68] sm:$0xff] %v357
    %466 = vst [vmem:[#allocation2 + $0x70] sm:$0xff] %v428
    %467 = vst [vmem:[#allocation2 + $0x78] sm:$0xff] %v430
    %468 = vst [vmem:[#allocation2 + $0x80] sm:$0xff] %v361
    %469 = vst [vmem:[#allocation2 + $0x88] sm:$0xff] %v363
    %470 = vst [vmem:[#allocation2 + $0x90] sm:$0xff] %v434
    %471 = vst [vmem:[#allocation2 + $0x98] sm:$0xff] %v436
    %472 = vst [vmem:[#allocation2 + $0xa0] sm:$0xff] %v365
    %473 = vst [vmem:[#allocation2 + $0xa8] sm:$0xff] %v367
    %474 = vst [vmem:[#allocation2 + $0xb0] sm:$0xff] %v438
    %475 = vst [vmem:[#allocation2 + $0xb8] sm:$0xff] %v440
    %476 = vst [vmem:[#allocation2 + $0xc0] sm:$0xff] %v371
    %477 = vst [vmem:[#allocation2 + $0xc8] sm:$0xff] %v373
    %478 = vst [vmem:[#allocation2 + $0xd0] sm:$0xff] %v444
    %479 = vst [vmem:[#allocation2 + $0xd8] sm:$0xff] %v446
    %480 = vst [vmem:[#allocation2 + $0xe0] sm:$0xff] %v375
    %481 = vst [vmem:[#allocation2 + $0xe8] sm:$0xff] %v377
    %482 = vst [vmem:[#allocation2 + $0xf0] sm:$0xff] %v448
    %483 = vst [vmem:[#allocation2 + $0xf8] sm:$0xff] %v450
    %v484 = vld [vmem:[#allocation8] sm:$0xff]
    %v485 = vld [vmem:[#allocation8 + $0x8] sm:$0xff]
    %v486 = vld [vmem:[#allocation8 + $0x10] sm:$0xff]
    %v487 = vld [vmem:[#allocation8 + $0x18] sm:$0xff]
    %v488 = vld [vmem:[#allocation8 + $0x20] sm:$0xff]
    %v489 = vld [vmem:[#allocation8 + $0x28] sm:$0xff]
    %v490 = vld [vmem:[#allocation8 + $0x30] sm:$0xff]
    %v491 = vld [vmem:[#allocation8 + $0x38] sm:$0xff]
    %v492 = vld [vmem:[#allocation8 + $0x40] sm:$0xff]
    %v493 = vld [vmem:[#allocation8 + $0x48] sm:$0xff]
    %v494 = vld [vmem:[#allocation8 + $0x50] sm:$0xff]
    %v495 = vld [vmem:[#allocation8 + $0x58] sm:$0xff]
    %v496 = vld [vmem:[#allocation8 + $0x60] sm:$0xff]
    %v497 = vld [vmem:[#allocation8 + $0x68] sm:$0xff]
    %v498 = vld [vmem:[#allocation8 + $0x70] sm:$0xff]
    %v499 = vld [vmem:[#allocation8 + $0x78] sm:$0xff]
    %v500 = vld [vmem:[#allocation8 + $0x80] sm:$0xff]
    %v501 = vld [vmem:[#allocation8 + $0x88] sm:$0xff]
    %v502 = vld [vmem:[#allocation8 + $0x90] sm:$0xff]
    %v503 = vld [vmem:[#allocation8 + $0x98] sm:$0xff]
    %v504 = vld [vmem:[#allocation8 + $0xa0] sm:$0xff]
    %v505 = vld [vmem:[#allocation8 + $0xa8] sm:$0xff]
    %v506 = vld [vmem:[#allocation8 + $0xb0] sm:$0xff]
    %v507 = vld [vmem:[#allocation8 + $0xb8] sm:$0xff]
    %v508 = vld [vmem:[#allocation8 + $0xc0] sm:$0xff]
    %v509 = vld [vmem:[#allocation8 + $0xc8] sm:$0xff]
    %v510 = vld [vmem:[#allocation8 + $0xd0] sm:$0xff]
    %v511 = vld [vmem:[#allocation8 + $0xd8] sm:$0xff]
    %v512 = vld [vmem:[#allocation8 + $0xe0] sm:$0xff]
    %v513 = vld [vmem:[#allocation8 + $0xe8] sm:$0xff]
    %v514 = vld [vmem:[#allocation8 + $0xf0] sm:$0xff]
    %v515 = vld [vmem:[#allocation8 + $0xf8] sm:$0xff]
    %s516 = smul.u32 0, 4
    %s517 = smul.addr %s516, 8
    %s518 = scalar_lea.vmem [#allocation2], %s517
    %v519 = vld [vmem:[%s518] sm:$0xff]
    %v520 = vld [vmem:[%s518 + $0x8] sm:$0xff]
    %v521 = vld [vmem:[%s518 + $0x10] sm:$0xff]
    %v522 = vld [vmem:[%s518 + $0x18] sm:$0xff]
    %v555 = vunpack.c.l.b16 %v484
    %v556 = vunpack.c.h.b16 %v484
    %v557 = vunpack.c.l.b16 %v485
    %v558 = vunpack.c.h.b16 %v485
    %v559 = vunpack.c.l.b16 %v486
    %v560 = vunpack.c.h.b16 %v486
    %v561 = vunpack.c.l.b16 %v487
    %v562 = vunpack.c.h.b16 %v487
    %v563 = vunpack.c.l.b16 %v488
    %v564 = vunpack.c.h.b16 %v488
    %v565 = vunpack.c.l.b16 %v489
    %v566 = vunpack.c.h.b16 %v489
    %v567 = vunpack.c.l.b16 %v490
    %v568 = vunpack.c.h.b16 %v490
    %v569 = vunpack.c.l.b16 %v491
    %v570 = vunpack.c.h.b16 %v491
    %v571 = vunpack.c.l.b16 %v492
    %v572 = vunpack.c.h.b16 %v492
    %v573 = vunpack.c.l.b16 %v493
    %v574 = vunpack.c.h.b16 %v493
    %v575 = vunpack.c.l.b16 %v494
    %v576 = vunpack.c.h.b16 %v494
    %v577 = vunpack.c.l.b16 %v495
    %v578 = vunpack.c.h.b16 %v495
    %v579 = vunpack.c.l.b16 %v496
    %v580 = vunpack.c.h.b16 %v496
    %v581 = vunpack.c.l.b16 %v497
    %v582 = vunpack.c.h.b16 %v497
    %v583 = vunpack.c.l.b16 %v498
    %v584 = vunpack.c.h.b16 %v498
    %v585 = vunpack.c.l.b16 %v499
    %v586 = vunpack.c.h.b16 %v499
    %v587 = vunpack.c.l.b16 %v500
    %v588 = vunpack.c.h.b16 %v500
    %v589 = vunpack.c.l.b16 %v501
    %v590 = vunpack.c.h.b16 %v501
    %v591 = vunpack.c.l.b16 %v502
    %v592 = vunpack.c.h.b16 %v502
    %v593 = vunpack.c.l.b16 %v503
    %v594 = vunpack.c.h.b16 %v503
    %v595 = vunpack.c.l.b16 %v504
    %v596 = vunpack.c.h.b16 %v504
    %v597 = vunpack.c.l.b16 %v505
    %v598 = vunpack.c.h.b16 %v505
    %v599 = vunpack.c.l.b16 %v506
    %v600 = vunpack.c.h.b16 %v506
    %v601 = vunpack.c.l.b16 %v507
    %v602 = vunpack.c.h.b16 %v507
    %v603 = vunpack.c.l.b16 %v508
    %v604 = vunpack.c.h.b16 %v508
    %v605 = vunpack.c.l.b16 %v509
    %v606 = vunpack.c.h.b16 %v509
    %v607 = vunpack.c.l.b16 %v510
    %v608 = vunpack.c.h.b16 %v510
    %v609 = vunpack.c.l.b16 %v511
    %v610 = vunpack.c.h.b16 %v511
    %v611 = vunpack.c.l.b16 %v512
    %v612 = vunpack.c.h.b16 %v512
    %v613 = vunpack.c.l.b16 %v513
    %v614 = vunpack.c.h.b16 %v513
    %v615 = vunpack.c.l.b16 %v514
    %v616 = vunpack.c.h.b16 %v514
    %v617 = vunpack.c.l.b16 %v515
    %v618 = vunpack.c.h.b16 %v515
    %v619 = vpack.c.b16 %v559, %v555
    %v620 = vpack.c.b16 %v560, %v556
    %v621 = vpack.c.b16 %v561, %v557
    %v622 = vpack.c.b16 %v562, %v558
    %v623 = vpack.c.b16 %v567, %v563
    %v624 = vpack.c.b16 %v568, %v564
    %v625 = vpack.c.b16 %v569, %v565
    %v626 = vpack.c.b16 %v570, %v566
    %v627 = vpack.c.b16 %v575, %v571
    %v628 = vpack.c.b16 %v576, %v572
    %v629 = vpack.c.b16 %v577, %v573
    %v630 = vpack.c.b16 %v578, %v574
    %v631 = vpack.c.b16 %v583, %v579
    %v632 = vpack.c.b16 %v584, %v580
    %v633 = vpack.c.b16 %v585, %v581
    %v634 = vpack.c.b16 %v586, %v582
    %v635 = vpack.c.b16 %v591, %v587
    %v636 = vpack.c.b16 %v592, %v588
    %v637 = vpack.c.b16 %v593, %v589
    %v638 = vpack.c.b16 %v594, %v590
    %v639 = vpack.c.b16 %v599, %v595
    %v640 = vpack.c.b16 %v600, %v596
    %v641 = vpack.c.b16 %v601, %v597
    %v642 = vpack.c.b16 %v602, %v598
    %v643 = vpack.c.b16 %v607, %v603
    %v644 = vpack.c.b16 %v608, %v604
    %v645 = vpack.c.b16 %v609, %v605
    %v646 = vpack.c.b16 %v610, %v606
    %v647 = vpack.c.b16 %v615, %v611
    %v648 = vpack.c.b16 %v616, %v612
    %v649 = vpack.c.b16 %v617, %v613
    %v650 = vpack.c.b16 %v618, %v614
    %683 = vmatprep.subr.bf16.mxu0 %v648
    %684 = vmatpush1.bf16.msra.mxu0 %v647
    %685 = vmatprep.subr.bf16.mxu0 %v644
    %686 = vmatpush1.bf16.msra.mxu0 %v643
    %687 = vmatprep.subr.bf16.mxu0 %v640
    %688 = vmatpush1.bf16.msra.mxu0 %v639
    %689 = vmatprep.subr.bf16.mxu0 %v636
    %690 = vmatpush1.bf16.msra.mxu0 %v635
    %691 = vmatprep.subr.bf16.mxu0 %v632
    %692 = vmatpush1.bf16.msra.mxu0 %v631
    %693 = vmatprep.subr.bf16.mxu0 %v628
    %694 = vmatpush1.bf16.msra.mxu0 %v627
    %695 = vmatprep.subr.bf16.mxu0 %v624
    %696 = vmatpush1.bf16.msra.mxu0 %v623
    %697 = vmatprep.subr.bf16.mxu0 %v620
    %698 = vmatpush1.bf16.msra.mxu0 %v619
    %699 = vmatprep.subr.bf16.mxu0 0
    %700 = vmatpush2.bf16.msra.mxu0 0
    %701 = vmatprep.subr.bf16.mxu0 0
    %702 = vmatpush2.bf16.msra.mxu0 0
    %703 = vmatprep.subr.bf16.mxu0 0
    %704 = vmatpush2.bf16.msra.mxu0 0
    %705 = vmatprep.subr.bf16.mxu0 0
    %706 = vmatpush2.bf16.msra.mxu0 0
    %707 = vmatprep.subr.bf16.mxu0 0
    %708 = vmatpush2.bf16.msra.mxu0 0
    %709 = vmatprep.subr.bf16.mxu0 0
    %710 = vmatpush2.bf16.msra.mxu0 0
    %711 = vmatprep.subr.bf16.mxu0 0
    %712 = vmatpush2.bf16.msra.mxu0 0
    %713 = vmatprep.subr.bf16.mxu0 0
    %714 = vmatpush2.bf16.msra.mxu0 0
    %715 = vmatprep.mubr.bf16.mxu0 0
    %716 = vmatmul.mubr.bf16.gmra.mxu0 0
    %v717 = vpop.f32.mrf.mxu0
    %v718 = vadd.f32 0.0, %v717
    %v719 = vpop.f32.mrf.mxu0
    %v720 = vadd.f32 0.0, %v719
    %v721 = vpop.f32.mrf.mxu0
    %v722 = vpop.f32.mrf.mxu0
    %723 = vdwg.mxu0
    %724 = vmatprep.subr.bf16.mxu0 %v650
    %725 = vmatpush1.bf16.msra.mxu0 %v649
    %726 = vmatprep.subr.bf16.mxu0 %v646
    %727 = vmatpush1.bf16.msra.mxu0 %v645
    %728 = vmatprep.subr.bf16.mxu0 %v642
    %729 = vmatpush1.bf16.msra.mxu0 %v641
    %730 = vmatprep.subr.bf16.mxu0 %v638
    %731 = vmatpush1.bf16.msra.mxu0 %v637
    %732 = vmatprep.subr.bf16.mxu0 %v634
    %733 = vmatpush1.bf16.msra.mxu0 %v633
    %734 = vmatprep.subr.bf16.mxu0 %v630
    %735 = vmatpush1.bf16.msra.mxu0 %v629
    %736 = vmatprep.subr.bf16.mxu0 %v626
    %737 = vmatpush1.bf16.msra.mxu0 %v625
    %738 = vmatprep.subr.bf16.mxu0 %v622
    %739 = vmatpush1.bf16.msra.mxu0 %v621
    %740 = vmatprep.subr.bf16.mxu0 0
    %741 = vmatpush2.bf16.msra.mxu0 0
    %742 = vmatprep.subr.bf16.mxu0 0
    %743 = vmatpush2.bf16.msra.mxu0 0
    %744 = vmatprep.subr.bf16.mxu0 0
    %745 = vmatpush2.bf16.msra.mxu0 0
    %746 = vmatprep.subr.bf16.mxu0 0
    %747 = vmatpush2.bf16.msra.mxu0 0
    %748 = vmatprep.subr.bf16.mxu0 0
    %749 = vmatpush2.bf16.msra.mxu0 0
    %750 = vmatprep.subr.bf16.mxu0 0
    %751 = vmatpush2.bf16.msra.mxu0 0
    %752 = vmatprep.subr.bf16.mxu0 0
    %753 = vmatpush2.bf16.msra.mxu0 0
    %754 = vmatprep.subr.bf16.mxu0 0
    %755 = vmatpush2.bf16.msra.mxu0 0
    %756 = vmatprep.mubr.bf16.mxu0 0
    %757 = vmatmul.mubr.bf16.gmra.mxu0 0
    %v758 = vpop.f32.mrf.mxu0
    %v759 = vadd.f32 0.0, %v758
    %v760 = vpop.f32.mrf.mxu0
    %v761 = vadd.f32 0.0, %v760
    %v762 = vpop.f32.mrf.mxu0
    %v763 = vpop.f32.mrf.mxu0
    %764 = vdwg.mxu0
    %v765 = vadd.f32 %v519, %v718
    %v766 = vadd.f32 %v520, %v720
    %v767 = vadd.f32 %v521, %v759
    %v768 = vadd.f32 %v522, %v761
    %v769 = vxor.u32 %v765, 2147483648
    %v770 = vmul.f32 %v769, 1.442695
    %v771 = vpow.pop %v770
    %v772 = vadd.f32 %v771, 1.0
    %v773 = vrcp.pop %v772
    %v774 = vmul.f32 1.0, %v773
    %v775 = vxor.u32 %v766, 2147483648
    %v776 = vmul.f32 %v775, 1.442695
    %v777 = vpow.pop %v776
    %v778 = vadd.f32 %v777, 1.0
    %v779 = vrcp.pop %v778
    %v780 = vmul.f32 1.0, %v779
    %v781 = vtanh.pop %v767
    %v782 = vxor.u32 %v768, 2147483648
    %v783 = vmul.f32 %v782, 1.442695
    %v784 = vpow.pop %v783
    %v785 = vadd.f32 %v784, 1.0
    %v786 = vrcp.pop %v785
    %v787 = vmul.f32 1.0, %v786
    %v788 = vmul.f32 %v780, 0.0
    %v789 = vmul.f32 %v774, %v781
    %v790 = vadd.f32 %v788, %v789
    %v791 = vtanh.pop %v790
    %v792 = vmul.f32 %v787, %v791
    %v793 = vpack.c.bf16 %v792, %v792
    %794 = vst [vmem:[#allocation9] sm:$0xf] %v793
    %s795 = smul.u32 1, 4
    %s796 = smul.addr %s795, 8
    %s797 = scalar_lea.vmem [#allocation2], %s796
    %v798 = vld [vmem:[%s797] sm:$0xff]
    %v799 = vld [vmem:[%s797 + $0x8] sm:$0xff]
    %v800 = vld [vmem:[%s797 + $0x10] sm:$0xff]
    %v801 = vld [vmem:[%s797 + $0x18] sm:$0xff]
    %802 = vmatprep.subr.bf16.mxu0 %v648
    %803 = vmatpush1.bf16.msra.mxu0 %v647
    %804 = vmatprep.subr.bf16.mxu0 %v644
    %805 = vmatpush1.bf16.msra.mxu0 %v643
    %806 = vmatprep.subr.bf16.mxu0 %v640
    %807 = vmatpush1.bf16.msra.mxu0 %v639
    %808 = vmatprep.subr.bf16.mxu0 %v636
    %809 = vmatpush1.bf16.msra.mxu0 %v635
    %810 = vmatprep.subr.bf16.mxu0 %v632
    %811 = vmatpush1.bf16.msra.mxu0 %v631
    %812 = vmatprep.subr.bf16.mxu0 %v628
    %813 = vmatpush1.bf16.msra.mxu0 %v627
    %814 = vmatprep.subr.bf16.mxu0 %v624
    %815 = vmatpush1.bf16.msra.mxu0 %v623
    %816 = vmatprep.subr.bf16.mxu0 %v620
    %817 = vmatpush1.bf16.msra.mxu0 %v619
    %818 = vmatprep.subr.bf16.mxu0 0
    %819 = vmatpush2.bf16.msra.mxu0 0
    %820 = vmatprep.subr.bf16.mxu0 0
    %821 = vmatpush2.bf16.msra.mxu0 0
    %822 = vmatprep.subr.bf16.mxu0 0
    %823 = vmatpush2.bf16.msra.mxu0 0
    %824 = vmatprep.subr.bf16.mxu0 0
    %825 = vmatpush2.bf16.msra.mxu0 0
    %826 = vmatprep.subr.bf16.mxu0 0
    %827 = vmatpush2.bf16.msra.mxu0 0
    %828 = vmatprep.subr.bf16.mxu0 0
    %829 = vmatpush2.bf16.msra.mxu0 0
    %830 = vmatprep.subr.bf16.mxu0 0
    %831 = vmatpush2.bf16.msra.mxu0 0
    %832 = vmatprep.subr.bf16.mxu0 0
    %833 = vmatpush2.bf16.msra.mxu0 0
    %834 = vmatprep.mubr.bf16.mxu0 0
    %835 = vmatmul.mubr.bf16.gmra.mxu0 %v793
    %v836 = vpop.f32.mrf.mxu0
    %v837 = vadd.f32 0.0, %v836
    %v838 = vpop.f32.mrf.mxu0
    %v839 = vadd.f32 0.0, %v838
    %v840 = vpop.f32.mrf.mxu0
    %v841 = vpop.f32.mrf.mxu0
    %842 = vdwg.mxu0
    %843 = vmatprep.subr.bf16.mxu0 %v650
    %844 = vmatpush1.bf16.msra.mxu0 %v649
    %845 = vmatprep.subr.bf16.mxu0 %v646
    %846 = vmatpush1.bf16.msra.mxu0 %v645
    %847 = vmatprep.subr.bf16.mxu0 %v642
    %848 = vmatpush1.bf16.msra.mxu0 %v641
    %849 = vmatprep.subr.bf16.mxu0 %v638
    %850 = vmatpush1.bf16.msra.mxu0 %v637
    %851 = vmatprep.subr.bf16.mxu0 %v634
    %852 = vmatpush1.bf16.msra.mxu0 %v633
    %853 = vmatprep.subr.bf16.mxu0 %v630
    %854 = vmatpush1.bf16.msra.mxu0 %v629
    %855 = vmatprep.subr.bf16.mxu0 %v626
    %856 = vmatpush1.bf16.msra.mxu0 %v625
    %857 = vmatprep.subr.bf16.mxu0 %v622
    %858 = vmatpush1.bf16.msra.mxu0 %v621
    %859 = vmatprep.subr.bf16.mxu0 0
    %860 = vmatpush2.bf16.msra.mxu0 0
    %861 = vmatprep.subr.bf16.mxu0 0
    %862 = vmatpush2.bf16.msra.mxu0 0
    %863 = vmatprep.subr.bf16.mxu0 0
    %864 = vmatpush2.bf16.msra.mxu0 0
    %865 = vmatprep.subr.bf16.mxu0 0
    %866 = vmatpush2.bf16.msra.mxu0 0
    %867 = vmatprep.subr.bf16.mxu0 0
    %868 = vmatpush2.bf16.msra.mxu0 0
    %869 = vmatprep.subr.bf16.mxu0 0
    %870 = vmatpush2.bf16.msra.mxu0 0
    %871 = vmatprep.subr.bf16.mxu0 0
    %872 = vmatpush2.bf16.msra.mxu0 0
    %873 = vmatprep.subr.bf16.mxu0 0
    %874 = vmatpush2.bf16.msra.mxu0 0
    %875 = vmatprep.mubr.bf16.mxu0 0
    %876 = vmatmul.mubr.bf16.gmra.mxu0 %v793
    %v877 = vpop.f32.mrf.mxu0
    %v878 = vadd.f32 0.0, %v877
    %v879 = vpop.f32.mrf.mxu0
    %v880 = vadd.f32 0.0, %v879
    %v881 = vpop.f32.mrf.mxu0
    %v882 = vpop.f32.mrf.mxu0
    %883 = vdwg.mxu0
    %v884 = vadd.f32 %v798, %v837
    %v885 = vadd.f32 %v799, %v839
    %v886 = vadd.f32 %v800, %v878
    %v887 = vadd.f32 %v801, %v880
    %v888 = vxor.u32 %v884, 2147483648
    %v889 = vmul.f32 %v888, 1.442695
    %v890 = vpow.pop %v889
    %v891 = vadd.f32 %v890, 1.0
    %v892 = vrcp.pop %v891
    %v893 = vmul.f32 1.0, %v892
    %v894 = vxor.u32 %v885, 2147483648
    %v895 = vmul.f32 %v894, 1.442695
    %v896 = vpow.pop %v895
    %v897 = vadd.f32 %v896, 1.0
    %v898 = vrcp.pop %v897
    %v899 = vmul.f32 1.0, %v898
    %v900 = vtanh.pop %v886
    %v901 = vxor.u32 %v887, 2147483648
    %v902 = vmul.f32 %v901, 1.442695
    %v903 = vpow.pop %v902
    %v904 = vadd.f32 %v903, 1.0
    %v905 = vrcp.pop %v904
    %v906 = vmul.f32 1.0, %v905
    %v907 = vmul.f32 %v899, %v790
    %v908 = vmul.f32 %v893, %v900
    %v909 = vadd.f32 %v907, %v908
    %v910 = vtanh.pop %v909
    %v911 = vmul.f32 %v906, %v910
    %v912 = vpack.c.bf16 %v911, %v911
    %s913 = scalar_lea.vmem [#allocation9], 4
    %914 = vst [vmem:[%s913] sm:$0xf] %v912
    %s915 = smul.u32 2, 4
    %s916 = smul.addr %s915, 8
    %s917 = scalar_lea.vmem [#allocation2], %s916
    %v918 = vld [vmem:[%s917] sm:$0xff]
    %v919 = vld [vmem:[%s917 + $0x8] sm:$0xff]
    %v920 = vld [vmem:[%s917 + $0x10] sm:$0xff]
    %v921 = vld [vmem:[%s917 + $0x18] sm:$0xff]
    %922 = vmatprep.subr.bf16.mxu0 %v648
    %923 = vmatpush1.bf16.msra.mxu0 %v647
    %924 = vmatprep.subr.bf16.mxu0 %v644
    %925 = vmatpush1.bf16.msra.mxu0 %v643
    %926 = vmatprep.subr.bf16.mxu0 %v640
    %927 = vmatpush1.bf16.msra.mxu0 %v639
    %928 = vmatprep.subr.bf16.mxu0 %v636
    %929 = vmatpush1.bf16.msra.mxu0 %v635
    %930 = vmatprep.subr.bf16.mxu0 %v632
    %931 = vmatpush1.bf16.msra.mxu0 %v631
    %932 = vmatprep.subr.bf16.mxu0 %v628
    %933 = vmatpush1.bf16.msra.mxu0 %v627
    %934 = vmatprep.subr.bf16.mxu0 %v624
    %935 = vmatpush1.bf16.msra.mxu0 %v623
    %936 = vmatprep.subr.bf16.mxu0 %v620
    %937 = vmatpush1.bf16.msra.mxu0 %v619
    %938 = vmatprep.subr.bf16.mxu0 0
    %939 = vmatpush2.bf16.msra.mxu0 0
    %940 = vmatprep.subr.bf16.mxu0 0
    %941 = vmatpush2.bf16.msra.mxu0 0
    %942 = vmatprep.subr.bf16.mxu0 0
    %943 = vmatpush2.bf16.msra.mxu0 0
    %944 = vmatprep.subr.bf16.mxu0 0
    %945 = vmatpush2.bf16.msra.mxu0 0
    %946 = vmatprep.subr.bf16.mxu0 0
    %947 = vmatpush2.bf16.msra.mxu0 0
    %948 = vmatprep.subr.bf16.mxu0 0
    %949 = vmatpush2.bf16.msra.mxu0 0
    %950 = vmatprep.subr.bf16.mxu0 0
    %951 = vmatpush2.bf16.msra.mxu0 0
    %952 = vmatprep.subr.bf16.mxu0 0
    %953 = vmatpush2.bf16.msra.mxu0 0
    %954 = vmatprep.mubr.bf16.mxu0 0
    %955 = vmatmul.mubr.bf16.gmra.mxu0 %v912
    %v956 = vpop.f32.mrf.mxu0
    %v957 = vadd.f32 0.0, %v956
    %v958 = vpop.f32.mrf.mxu0
    %v959 = vadd.f32 0.0, %v958
    %v960 = vpop.f32.mrf.mxu0
    %v961 = vpop.f32.mrf.mxu0
    %962 = vdwg.mxu0
    %963 = vmatprep.subr.bf16.mxu0 %v650
    %964 = vmatpush1.bf16.msra.mxu0 %v649
    %965 = vmatprep.subr.bf16.mxu0 %v646
    %966 = vmatpush1.bf16.msra.mxu0 %v645
    %967 = vmatprep.subr.bf16.mxu0 %v642
    %968 = vmatpush1.bf16.msra.mxu0 %v641
    %969 = vmatprep.subr.bf16.mxu0 %v638
    %970 = vmatpush1.bf16.msra.mxu0 %v637
    %971 = vmatprep.subr.bf16.mxu0 %v634
    %972 = vmatpush1.bf16.msra.mxu0 %v633
    %973 = vmatprep.subr.bf16.mxu0 %v630
    %974 = vmatpush1.bf16.msra.mxu0 %v629
    %975 = vmatprep.subr.bf16.mxu0 %v626
    %976 = vmatpush1.bf16.msra.mxu0 %v625
    %977 = vmatprep.subr.bf16.mxu0 %v622
    %978 = vmatpush1.bf16.msra.mxu0 %v621
    %979 = vmatprep.subr.bf16.mxu0 0
    %980 = vmatpush2.bf16.msra.mxu0 0
    %981 = vmatprep.subr.bf16.mxu0 0
    %982 = vmatpush2.bf16.msra.mxu0 0
    %983 = vmatprep.subr.bf16.mxu0 0
    %984 = vmatpush2.bf16.msra.mxu0 0
    %985 = vmatprep.subr.bf16.mxu0 0
    %986 = vmatpush2.bf16.msra.mxu0 0
    %987 = vmatprep.subr.bf16.mxu0 0
    %988 = vmatpush2.bf16.msra.mxu0 0
    %989 = vmatprep.subr.bf16.mxu0 0
    %990 = vmatpush2.bf16.msra.mxu0 0
    %991 = vmatprep.subr.bf16.mxu0 0
    %992 = vmatpush2.bf16.msra.mxu0 0
    %993 = vmatprep.subr.bf16.mxu0 0
    %994 = vmatpush2.bf16.msra.mxu0 0
    %995 = vmatprep.mubr.bf16.mxu0 0
    %996 = vmatmul.mubr.bf16.gmra.mxu0 %v912
    %v997 = vpop.f32.mrf.mxu0
    %v998 = vadd.f32 0.0, %v997
    %v999 = vpop.f32.mrf.mxu0
    %v1000 = vadd.f32 0.0, %v999
    %v1001 = vpop.f32.mrf.mxu0
    %v1002 = vpop.f32.mrf.mxu0
    %1003 = vdwg.mxu0
    %v1004 = vadd.f32 %v918, %v957
    %v1005 = vadd.f32 %v919, %v959
    %v1006 = vadd.f32 %v920, %v998
    %v1007 = vadd.f32 %v921, %v1000
    %v1008 = vxor.u32 %v1004, 2147483648
    %v1009 = vmul.f32 %v1008, 1.442695
    %v1010 = vpow.pop %v1009
    %v1011 = vadd.f32 %v1010, 1.0
    %v1012 = vrcp.pop %v1011
    %v1013 = vmul.f32 1.0, %v1012
    %v1014 = vxor.u32 %v1005, 2147483648
    %v1015 = vmul.f32 %v1014, 1.442695
    %v1016 = vpow.pop %v1015
    %v1017 = vadd.f32 %v1016, 1.0
    %v1018 = vrcp.pop %v1017
    %v1019 = vmul.f32 1.0, %v1018
    %v1020 = vtanh.pop %v1006
    %v1021 = vxor.u32 %v1007, 2147483648
    %v1022 = vmul.f32 %v1021, 1.442695
    %v1023 = vpow.pop %v1022
    %v1024 = vadd.f32 %v1023, 1.0
    %v1025 = vrcp.pop %v1024
    %v1026 = vmul.f32 1.0, %v1025
    %v1027 = vmul.f32 %v1019, %v909
    %v1028 = vmul.f32 %v1013, %v1020
    %v1029 = vadd.f32 %v1027, %v1028
    %v1030 = vtanh.pop %v1029
    %v1031 = vmul.f32 %v1026, %v1030
    %v1032 = vpack.c.bf16 %v1031, %v1031
    %s1033 = scalar_lea.vmem [#allocation9], 8
    %1034 = vst [vmem:[%s1033] sm:$0xf] %v1032
    %s1035 = smul.u32 3, 4
    %s1036 = smul.addr %s1035, 8
    %s1037 = scalar_lea.vmem [#allocation2], %s1036
    %v1038 = vld [vmem:[%s1037] sm:$0xff]
    %v1039 = vld [vmem:[%s1037 + $0x8] sm:$0xff]
    %v1040 = vld [vmem:[%s1037 + $0x10] sm:$0xff]
    %v1041 = vld [vmem:[%s1037 + $0x18] sm:$0xff]
    %1042 = vmatprep.subr.bf16.mxu0 %v648
    %1043 = vmatpush1.bf16.msra.mxu0 %v647
    %1044 = vmatprep.subr.bf16.mxu0 %v644
    %1045 = vmatpush1.bf16.msra.mxu0 %v643
    %1046 = vmatprep.subr.bf16.mxu0 %v640
    %1047 = vmatpush1.bf16.msra.mxu0 %v639
    %1048 = vmatprep.subr.bf16.mxu0 %v636
    %1049 = vmatpush1.bf16.msra.mxu0 %v635
    %1050 = vmatprep.subr.bf16.mxu0 %v632
    %1051 = vmatpush1.bf16.msra.mxu0 %v631
    %1052 = vmatprep.subr.bf16.mxu0 %v628
    %1053 = vmatpush1.bf16.msra.mxu0 %v627
    %1054 = vmatprep.subr.bf16.mxu0 %v624
    %1055 = vmatpush1.bf16.msra.mxu0 %v623
    %1056 = vmatprep.subr.bf16.mxu0 %v620
    %1057 = vmatpush1.bf16.msra.mxu0 %v619
    %1058 = vmatprep.subr.bf16.mxu0 0
    %1059 = vmatpush2.bf16.msra.mxu0 0
    %1060 = vmatprep.subr.bf16.mxu0 0
    %1061 = vmatpush2.bf16.msra.mxu0 0
    %1062 = vmatprep.subr.bf16.mxu0 0
    %1063 = vmatpush2.bf16.msra.mxu0 0
    %1064 = vmatprep.subr.bf16.mxu0 0
    %1065 = vmatpush2.bf16.msra.mxu0 0
    %1066 = vmatprep.subr.bf16.mxu0 0
    %1067 = vmatpush2.bf16.msra.mxu0 0
    %1068 = vmatprep.subr.bf16.mxu0 0
    %1069 = vmatpush2.bf16.msra.mxu0 0
    %1070 = vmatprep.subr.bf16.mxu0 0
    %1071 = vmatpush2.bf16.msra.mxu0 0
    %1072 = vmatprep.subr.bf16.mxu0 0
    %1073 = vmatpush2.bf16.msra.mxu0 0
    %1074 = vmatprep.mubr.bf16.mxu0 0
    %1075 = vmatmul.mubr.bf16.gmra.mxu0 %v1032
    %v1076 = vpop.f32.mrf.mxu0
    %v1077 = vadd.f32 0.0, %v1076
    %v1078 = vpop.f32.mrf.mxu0
    %v1079 = vadd.f32 0.0, %v1078
    %v1080 = vpop.f32.mrf.mxu0
    %v1081 = vpop.f32.mrf.mxu0
    %1082 = vdwg.mxu0
    %1083 = vmatprep.subr.bf16.mxu0 %v650
    %1084 = vmatpush1.bf16.msra.mxu0 %v649
    %1085 = vmatprep.subr.bf16.mxu0 %v646
    %1086 = vmatpush1.bf16.msra.mxu0 %v645
    %1087 = vmatprep.subr.bf16.mxu0 %v642
    %1088 = vmatpush1.bf16.msra.mxu0 %v641
    %1089 = vmatprep.subr.bf16.mxu0 %v638
    %1090 = vmatpush1.bf16.msra.mxu0 %v637
    %1091 = vmatprep.subr.bf16.mxu0 %v634
    %1092 = vmatpush1.bf16.msra.mxu0 %v633
    %1093 = vmatprep.subr.bf16.mxu0 %v630
    %1094 = vmatpush1.bf16.msra.mxu0 %v629
    %1095 = vmatprep.subr.bf16.mxu0 %v626
    %1096 = vmatpush1.bf16.msra.mxu0 %v625
    %1097 = vmatprep.subr.bf16.mxu0 %v622
    %1098 = vmatpush1.bf16.msra.mxu0 %v621
    %1099 = vmatprep.subr.bf16.mxu0 0
    %1100 = vmatpush2.bf16.msra.mxu0 0
    %1101 = vmatprep.subr.bf16.mxu0 0
    %1102 = vmatpush2.bf16.msra.mxu0 0
    %1103 = vmatprep.subr.bf16.mxu0 0
    %1104 = vmatpush2.bf16.msra.mxu0 0
    %1105 = vmatprep.subr.bf16.mxu0 0
    %1106 = vmatpush2.bf16.msra.mxu0 0
    %1107 = vmatprep.subr.bf16.mxu0 0
    %1108 = vmatpush2.bf16.msra.mxu0 0
    %1109 = vmatprep.subr.bf16.mxu0 0
    %1110 = vmatpush2.bf16.msra.mxu0 0
    %1111 = vmatprep.subr.bf16.mxu0 0
    %1112 = vmatpush2.bf16.msra.mxu0 0
    %1113 = vmatprep.subr.bf16.mxu0 0
    %1114 = vmatpush2.bf16.msra.mxu0 0
    %1115 = vmatprep.mubr.bf16.mxu0 0
    %1116 = vmatmul.mubr.bf16.gmra.mxu0 %v1032
    %v1117 = vpop.f32.mrf.mxu0
    %v1118 = vadd.f32 0.0, %v1117
    %v1119 = vpop.f32.mrf.mxu0
    %v1120 = vadd.f32 0.0, %v1119
    %v1121 = vpop.f32.mrf.mxu0
    %v1122 = vpop.f32.mrf.mxu0
    %1123 = vdwg.mxu0
    %v1124 = vadd.f32 %v1038, %v1077
    %v1125 = vadd.f32 %v1039, %v1079
    %v1126 = vadd.f32 %v1040, %v1118
    %v1127 = vadd.f32 %v1041, %v1120
    %v1128 = vxor.u32 %v1124, 2147483648
    %v1129 = vmul.f32 %v1128, 1.442695
    %v1130 = vpow.pop %v1129
    %v1131 = vadd.f32 %v1130, 1.0
    %v1132 = vrcp.pop %v1131
    %v1133 = vmul.f32 1.0, %v1132
    %v1134 = vxor.u32 %v1125, 2147483648
    %v1135 = vmul.f32 %v1134, 1.442695
    %v1136 = vpow.pop %v1135
    %v1137 = vadd.f32 %v1136, 1.0
    %v1138 = vrcp.pop %v1137
    %v1139 = vmul.f32 1.0, %v1138
    %v1140 = vtanh.pop %v1126
    %v1141 = vxor.u32 %v1127, 2147483648
    %v1142 = vmul.f32 %v1141, 1.442695
    %v1143 = vpow.pop %v1142
    %v1144 = vadd.f32 %v1143, 1.0
    %v1145 = vrcp.pop %v1144
    %v1146 = vmul.f32 1.0, %v1145
    %v1147 = vmul.f32 %v1139, %v1029
    %v1148 = vmul.f32 %v1133, %v1140
    %v1149 = vadd.f32 %v1147, %v1148
    %v1150 = vtanh.pop %v1149
    %v1151 = vmul.f32 %v1146, %v1150
    %v1152 = vpack.c.bf16 %v1151, %v1151
    %s1153 = scalar_lea.vmem [#allocation9], 12
    %1154 = vst [vmem:[%s1153] sm:$0xf] %v1152
    %s1155 = smul.u32 4, 4
    %s1156 = smul.addr %s1155, 8
    %s1157 = scalar_lea.vmem [#allocation2], %s1156
    %v1158 = vld [vmem:[%s1157] sm:$0xff]
    %v1159 = vld [vmem:[%s1157 + $0x8] sm:$0xff]
    %v1160 = vld [vmem:[%s1157 + $0x10] sm:$0xff]
    %v1161 = vld [vmem:[%s1157 + $0x18] sm:$0xff]
    %1162 = vmatprep.subr.bf16.mxu0 %v648
    %1163 = vmatpush1.bf16.msra.mxu0 %v647
    %1164 = vmatprep.subr.bf16.mxu0 %v644
    %1165 = vmatpush1.bf16.msra.mxu0 %v643
    %1166 = vmatprep.subr.bf16.mxu0 %v640
    %1167 = vmatpush1.bf16.msra.mxu0 %v639
    %1168 = vmatprep.subr.bf16.mxu0 %v636
    %1169 = vmatpush1.bf16.msra.mxu0 %v635
    %1170 = vmatprep.subr.bf16.mxu0 %v632
    %1171 = vmatpush1.bf16.msra.mxu0 %v631
    %1172 = vmatprep.subr.bf16.mxu0 %v628
    %1173 = vmatpush1.bf16.msra.mxu0 %v627
    %1174 = vmatprep.subr.bf16.mxu0 %v624
    %1175 = vmatpush1.bf16.msra.mxu0 %v623
    %1176 = vmatprep.subr.bf16.mxu0 %v620
    %1177 = vmatpush1.bf16.msra.mxu0 %v619
    %1178 = vmatprep.subr.bf16.mxu0 0
    %1179 = vmatpush2.bf16.msra.mxu0 0
    %1180 = vmatprep.subr.bf16.mxu0 0
    %1181 = vmatpush2.bf16.msra.mxu0 0
    %1182 = vmatprep.subr.bf16.mxu0 0
    %1183 = vmatpush2.bf16.msra.mxu0 0
    %1184 = vmatprep.subr.bf16.mxu0 0
    %1185 = vmatpush2.bf16.msra.mxu0 0
    %1186 = vmatprep.subr.bf16.mxu0 0
    %1187 = vmatpush2.bf16.msra.mxu0 0
    %1188 = vmatprep.subr.bf16.mxu0 0
    %1189 = vmatpush2.bf16.msra.mxu0 0
    %1190 = vmatprep.subr.bf16.mxu0 0
    %1191 = vmatpush2.bf16.msra.mxu0 0
    %1192 = vmatprep.subr.bf16.mxu0 0
    %1193 = vmatpush2.bf16.msra.mxu0 0
    %1194 = vmatprep.mubr.bf16.mxu0 0
    %1195 = vmatmul.mubr.bf16.gmra.mxu0 %v1152
    %v1196 = vpop.f32.mrf.mxu0
    %v1197 = vadd.f32 0.0, %v1196
    %v1198 = vpop.f32.mrf.mxu0
    %v1199 = vadd.f32 0.0, %v1198
    %v1200 = vpop.f32.mrf.mxu0
    %v1201 = vpop.f32.mrf.mxu0
    %1202 = vdwg.mxu0
    %1203 = vmatprep.subr.bf16.mxu0 %v650
    %1204 = vmatpush1.bf16.msra.mxu0 %v649
    %1205 = vmatprep.subr.bf16.mxu0 %v646
    %1206 = vmatpush1.bf16.msra.mxu0 %v645
    %1207 = vmatprep.subr.bf16.mxu0 %v642
    %1208 = vmatpush1.bf16.msra.mxu0 %v641
    %1209 = vmatprep.subr.bf16.mxu0 %v638
    %1210 = vmatpush1.bf16.msra.mxu0 %v637
    %1211 = vmatprep.subr.bf16.mxu0 %v634
    %1212 = vmatpush1.bf16.msra.mxu0 %v633
    %1213 = vmatprep.subr.bf16.mxu0 %v630
    %1214 = vmatpush1.bf16.msra.mxu0 %v629
    %1215 = vmatprep.subr.bf16.mxu0 %v626
    %1216 = vmatpush1.bf16.msra.mxu0 %v625
    %1217 = vmatprep.subr.bf16.mxu0 %v622
    %1218 = vmatpush1.bf16.msra.mxu0 %v621
    %1219 = vmatprep.subr.bf16.mxu0 0
    %1220 = vmatpush2.bf16.msra.mxu0 0
    %1221 = vmatprep.subr.bf16.mxu0 0
    %1222 = vmatpush2.bf16.msra.mxu0 0
    %1223 = vmatprep.subr.bf16.mxu0 0
    %1224 = vmatpush2.bf16.msra.mxu0 0
    %1225 = vmatprep.subr.bf16.mxu0 0
    %1226 = vmatpush2.bf16.msra.mxu0 0
    %1227 = vmatprep.subr.bf16.mxu0 0
    %1228 = vmatpush2.bf16.msra.mxu0 0
    %1229 = vmatprep.subr.bf16.mxu0 0
    %1230 = vmatpush2.bf16.msra.mxu0 0
    %1231 = vmatprep.subr.bf16.mxu0 0
    %1232 = vmatpush2.bf16.msra.mxu0 0
    %1233 = vmatprep.subr.bf16.mxu0 0
    %1234 = vmatpush2.bf16.msra.mxu0 0
    %1235 = vmatprep.mubr.bf16.mxu0 0
    %1236 = vmatmul.mubr.bf16.gmra.mxu0 %v1152
    %v1237 = vpop.f32.mrf.mxu0
    %v1238 = vadd.f32 0.0, %v1237
    %v1239 = vpop.f32.mrf.mxu0
    %v1240 = vadd.f32 0.0, %v1239
    %v1241 = vpop.f32.mrf.mxu0
    %v1242 = vpop.f32.mrf.mxu0
    %1243 = vdwg.mxu0
    %v1244 = vadd.f32 %v1158, %v1197
    %v1245 = vadd.f32 %v1159, %v1199
    %v1246 = vadd.f32 %v1160, %v1238
    %v1247 = vadd.f32 %v1161, %v1240
    %v1248 = vxor.u32 %v1244, 2147483648
    %v1249 = vmul.f32 %v1248, 1.442695
    %v1250 = vpow.pop %v1249
    %v1251 = vadd.f32 %v1250, 1.0
    %v1252 = vrcp.pop %v1251
    %v1253 = vmul.f32 1.0, %v1252
    %v1254 = vxor.u32 %v1245, 2147483648
    %v1255 = vmul.f32 %v1254, 1.442695
    %v1256 = vpow.pop %v1255
    %v1257 = vadd.f32 %v1256, 1.0
    %v1258 = vrcp.pop %v1257
    %v1259 = vmul.f32 1.0, %v1258
    %v1260 = vtanh.pop %v1246
    %v1261 = vxor.u32 %v1247, 2147483648
    %v1262 = vmul.f32 %v1261, 1.442695
    %v1263 = vpow.pop %v1262
    %v1264 = vadd.f32 %v1263, 1.0
    %v1265 = vrcp.pop %v1264
    %v1266 = vmul.f32 1.0, %v1265
    %v1267 = vmul.f32 %v1259, %v1149
    %v1268 = vmul.f32 %v1253, %v1260
    %v1269 = vadd.f32 %v1267, %v1268
    %v1270 = vtanh.pop %v1269
    %v1271 = vmul.f32 %v1266, %v1270
    %v1272 = vpack.c.bf16 %v1271, %v1271
    %s1273 = scalar_lea.vmem [#allocation9], 16
    %1274 = vst [vmem:[%s1273] sm:$0xf] %v1272
    %s1275 = smul.u32 5, 4
    %s1276 = smul.addr %s1275, 8
    %s1277 = scalar_lea.vmem [#allocation2], %s1276
    %v1278 = vld [vmem:[%s1277] sm:$0xff]
    %v1279 = vld [vmem:[%s1277 + $0x8] sm:$0xff]
    %v1280 = vld [vmem:[%s1277 + $0x10] sm:$0xff]
    %v1281 = vld [vmem:[%s1277 + $0x18] sm:$0xff]
    %1282 = vmatprep.subr.bf16.mxu0 %v648
    %1283 = vmatpush1.bf16.msra.mxu0 %v647
    %1284 = vmatprep.subr.bf16.mxu0 %v644
    %1285 = vmatpush1.bf16.msra.mxu0 %v643
    %1286 = vmatprep.subr.bf16.mxu0 %v640
    %1287 = vmatpush1.bf16.msra.mxu0 %v639
    %1288 = vmatprep.subr.bf16.mxu0 %v636
    %1289 = vmatpush1.bf16.msra.mxu0 %v635
    %1290 = vmatprep.subr.bf16.mxu0 %v632
    %1291 = vmatpush1.bf16.msra.mxu0 %v631
    %1292 = vmatprep.subr.bf16.mxu0 %v628
    %1293 = vmatpush1.bf16.msra.mxu0 %v627
    %1294 = vmatprep.subr.bf16.mxu0 %v624
    %1295 = vmatpush1.bf16.msra.mxu0 %v623
    %1296 = vmatprep.subr.bf16.mxu0 %v620
    %1297 = vmatpush1.bf16.msra.mxu0 %v619
    %1298 = vmatprep.subr.bf16.mxu0 0
    %1299 = vmatpush2.bf16.msra.mxu0 0
    %1300 = vmatprep.subr.bf16.mxu0 0
    %1301 = vmatpush2.bf16.msra.mxu0 0
    %1302 = vmatprep.subr.bf16.mxu0 0
    %1303 = vmatpush2.bf16.msra.mxu0 0
    %1304 = vmatprep.subr.bf16.mxu0 0
    %1305 = vmatpush2.bf16.msra.mxu0 0
    %1306 = vmatprep.subr.bf16.mxu0 0
    %1307 = vmatpush2.bf16.msra.mxu0 0
    %1308 = vmatprep.subr.bf16.mxu0 0
    %1309 = vmatpush2.bf16.msra.mxu0 0
    %1310 = vmatprep.subr.bf16.mxu0 0
    %1311 = vmatpush2.bf16.msra.mxu0 0
    %1312 = vmatprep.subr.bf16.mxu0 0
    %1313 = vmatpush2.bf16.msra.mxu0 0
    %1314 = vmatprep.mubr.bf16.mxu0 0
    %1315 = vmatmul.mubr.bf16.gmra.mxu0 %v1272
    %v1316 = vpop.f32.mrf.mxu0
    %v1317 = vadd.f32 0.0, %v1316
    %v1318 = vpop.f32.mrf.mxu0
    %v1319 = vadd.f32 0.0, %v1318
    %v1320 = vpop.f32.mrf.mxu0
    %v1321 = vpop.f32.mrf.mxu0
    %1322 = vdwg.mxu0
    %1323 = vmatprep.subr.bf16.mxu0 %v650
    %1324 = vmatpush1.bf16.msra.mxu0 %v649
    %1325 = vmatprep.subr.bf16.mxu0 %v646
    %1326 = vmatpush1.bf16.msra.mxu0 %v645
    %1327 = vmatprep.subr.bf16.mxu0 %v642
    %1328 = vmatpush1.bf16.msra.mxu0 %v641
    %1329 = vmatprep.subr.bf16.mxu0 %v638
    %1330 = vmatpush1.bf16.msra.mxu0 %v637
    %1331 = vmatprep.subr.bf16.mxu0 %v634
    %1332 = vmatpush1.bf16.msra.mxu0 %v633
    %1333 = vmatprep.subr.bf16.mxu0 %v630
    %1334 = vmatpush1.bf16.msra.mxu0 %v629
    %1335 = vmatprep.subr.bf16.mxu0 %v626
    %1336 = vmatpush1.bf16.msra.mxu0 %v625
    %1337 = vmatprep.subr.bf16.mxu0 %v622
    %1338 = vmatpush1.bf16.msra.mxu0 %v621
    %1339 = vmatprep.subr.bf16.mxu0 0
    %1340 = vmatpush2.bf16.msra.mxu0 0
    %1341 = vmatprep.subr.bf16.mxu0 0
    %1342 = vmatpush2.bf16.msra.mxu0 0
    %1343 = vmatprep.subr.bf16.mxu0 0
    %1344 = vmatpush2.bf16.msra.mxu0 0
    %1345 = vmatprep.subr.bf16.mxu0 0
    %1346 = vmatpush2.bf16.msra.mxu0 0
    %1347 = vmatprep.subr.bf16.mxu0 0
    %1348 = vmatpush2.bf16.msra.mxu0 0
    %1349 = vmatprep.subr.bf16.mxu0 0
    %1350 = vmatpush2.bf16.msra.mxu0 0
    %1351 = vmatprep.subr.bf16.mxu0 0
    %1352 = vmatpush2.bf16.msra.mxu0 0
    %1353 = vmatprep.subr.bf16.mxu0 0
    %1354 = vmatpush2.bf16.msra.mxu0 0
    %1355 = vmatprep.mubr.bf16.mxu0 0
    %1356 = vmatmul.mubr.bf16.gmra.mxu0 %v1272
    %v1357 = vpop.f32.mrf.mxu0
    %v1358 = vadd.f32 0.0, %v1357
    %v1359 = vpop.f32.mrf.mxu0
    %v1360 = vadd.f32 0.0, %v1359
    %v1361 = vpop.f32.mrf.mxu0
    %v1362 = vpop.f32.mrf.mxu0
    %1363 = vdwg.mxu0
    %v1364 = vadd.f32 %v1278, %v1317
    %v1365 = vadd.f32 %v1279, %v1319
    %v1366 = vadd.f32 %v1280, %v1358
    %v1367 = vadd.f32 %v1281, %v1360
    %v1368 = vxor.u32 %v1364, 2147483648
    %v1369 = vmul.f32 %v1368, 1.442695
    %v1370 = vpow.pop %v1369
    %v1371 = vadd.f32 %v1370, 1.0
    %v1372 = vrcp.pop %v1371
    %v1373 = vmul.f32 1.0, %v1372
    %v1374 = vxor.u32 %v1365, 2147483648
    %v1375 = vmul.f32 %v1374, 1.442695
    %v1376 = vpow.pop %v1375
    %v1377 = vadd.f32 %v1376, 1.0
    %v1378 = vrcp.pop %v1377
    %v1379 = vmul.f32 1.0, %v1378
    %v1380 = vtanh.pop %v1366
    %v1381 = vxor.u32 %v1367, 2147483648
    %v1382 = vmul.f32 %v1381, 1.442695
    %v1383 = vpow.pop %v1382
    %v1384 = vadd.f32 %v1383, 1.0
    %v1385 = vrcp.pop %v1384
    %v1386 = vmul.f32 1.0, %v1385
    %v1387 = vmul.f32 %v1379, %v1269
    %v1388 = vmul.f32 %v1373, %v1380
    %v1389 = vadd.f32 %v1387, %v1388
    %v1390 = vtanh.pop %v1389
    %v1391 = vmul.f32 %v1386, %v1390
    %v1392 = vpack.c.bf16 %v1391, %v1391
    %s1393 = scalar_lea.vmem [#allocation9], 20
    %1394 = vst [vmem:[%s1393] sm:$0xf] %v1392
    %s1395 = smul.u32 6, 4
    %s1396 = smul.addr %s1395, 8
    %s1397 = scalar_lea.vmem [#allocation2], %s1396
    %v1398 = vld [vmem:[%s1397] sm:$0xff]
    %v1399 = vld [vmem:[%s1397 + $0x8] sm:$0xff]
    %v1400 = vld [vmem:[%s1397 + $0x10] sm:$0xff]
    %v1401 = vld [vmem:[%s1397 + $0x18] sm:$0xff]
    %1402 = vmatprep.subr.bf16.mxu0 %v648
    %1403 = vmatpush1.bf16.msra.mxu0 %v647
    %1404 = vmatprep.subr.bf16.mxu0 %v644
    %1405 = vmatpush1.bf16.msra.mxu0 %v643
    %1406 = vmatprep.subr.bf16.mxu0 %v640
    %1407 = vmatpush1.bf16.msra.mxu0 %v639
    %1408 = vmatprep.subr.bf16.mxu0 %v636
    %1409 = vmatpush1.bf16.msra.mxu0 %v635
    %1410 = vmatprep.subr.bf16.mxu0 %v632
    %1411 = vmatpush1.bf16.msra.mxu0 %v631
    %1412 = vmatprep.subr.bf16.mxu0 %v628
    %1413 = vmatpush1.bf16.msra.mxu0 %v627
    %1414 = vmatprep.subr.bf16.mxu0 %v624
    %1415 = vmatpush1.bf16.msra.mxu0 %v623
    %1416 = vmatprep.subr.bf16.mxu0 %v620
    %1417 = vmatpush1.bf16.msra.mxu0 %v619
    %1418 = vmatprep.subr.bf16.mxu0 0
    %1419 = vmatpush2.bf16.msra.mxu0 0
    %1420 = vmatprep.subr.bf16.mxu0 0
    %1421 = vmatpush2.bf16.msra.mxu0 0
    %1422 = vmatprep.subr.bf16.mxu0 0
    %1423 = vmatpush2.bf16.msra.mxu0 0
    %1424 = vmatprep.subr.bf16.mxu0 0
    %1425 = vmatpush2.bf16.msra.mxu0 0
    %1426 = vmatprep.subr.bf16.mxu0 0
    %1427 = vmatpush2.bf16.msra.mxu0 0
    %1428 = vmatprep.subr.bf16.mxu0 0
    %1429 = vmatpush2.bf16.msra.mxu0 0
    %1430 = vmatprep.subr.bf16.mxu0 0
    %1431 = vmatpush2.bf16.msra.mxu0 0
    %1432 = vmatprep.subr.bf16.mxu0 0
    %1433 = vmatpush2.bf16.msra.mxu0 0
    %1434 = vmatprep.mubr.bf16.mxu0 0
    %1435 = vmatmul.mubr.bf16.gmra.mxu0 %v1392
    %v1436 = vpop.f32.mrf.mxu0
    %v1437 = vadd.f32 0.0, %v1436
    %v1438 = vpop.f32.mrf.mxu0
    %v1439 = vadd.f32 0.0, %v1438
    %v1440 = vpop.f32.mrf.mxu0
    %v1441 = vpop.f32.mrf.mxu0
    %1442 = vdwg.mxu0
    %1443 = vmatprep.subr.bf16.mxu0 %v650
    %1444 = vmatpush1.bf16.msra.mxu0 %v649
    %1445 = vmatprep.subr.bf16.mxu0 %v646
    %1446 = vmatpush1.bf16.msra.mxu0 %v645
    %1447 = vmatprep.subr.bf16.mxu0 %v642
    %1448 = vmatpush1.bf16.msra.mxu0 %v641
    %1449 = vmatprep.subr.bf16.mxu0 %v638
    %1450 = vmatpush1.bf16.msra.mxu0 %v637
    %1451 = vmatprep.subr.bf16.mxu0 %v634
    %1452 = vmatpush1.bf16.msra.mxu0 %v633
    %1453 = vmatprep.subr.bf16.mxu0 %v630
    %1454 = vmatpush1.bf16.msra.mxu0 %v629
    %1455 = vmatprep.subr.bf16.mxu0 %v626
    %1456 = vmatpush1.bf16.msra.mxu0 %v625
    %1457 = vmatprep.subr.bf16.mxu0 %v622
    %1458 = vmatpush1.bf16.msra.mxu0 %v621
    %1459 = vmatprep.subr.bf16.mxu0 0
    %1460 = vmatpush2.bf16.msra.mxu0 0
    %1461 = vmatprep.subr.bf16.mxu0 0
    %1462 = vmatpush2.bf16.msra.mxu0 0
    %1463 = vmatprep.subr.bf16.mxu0 0
    %1464 = vmatpush2.bf16.msra.mxu0 0
    %1465 = vmatprep.subr.bf16.mxu0 0
    %1466 = vmatpush2.bf16.msra.mxu0 0
    %1467 = vmatprep.subr.bf16.mxu0 0
    %1468 = vmatpush2.bf16.msra.mxu0 0
    %1469 = vmatprep.subr.bf16.mxu0 0
    %1470 = vmatpush2.bf16.msra.mxu0 0
    %1471 = vmatprep.subr.bf16.mxu0 0
    %1472 = vmatpush2.bf16.msra.mxu0 0
    %1473 = vmatprep.subr.bf16.mxu0 0
    %1474 = vmatpush2.bf16.msra.mxu0 0
    %1475 = vmatprep.mubr.bf16.mxu0 0
    %1476 = vmatmul.mubr.bf16.gmra.mxu0 %v1392
    %v1477 = vpop.f32.mrf.mxu0
    %v1478 = vadd.f32 0.0, %v1477
    %v1479 = vpop.f32.mrf.mxu0
    %v1480 = vadd.f32 0.0, %v1479
    %v1481 = vpop.f32.mrf.mxu0
    %v1482 = vpop.f32.mrf.mxu0
    %1483 = vdwg.mxu0
    %v1484 = vadd.f32 %v1398, %v1437
    %v1485 = vadd.f32 %v1399, %v1439
    %v1486 = vadd.f32 %v1400, %v1478
    %v1487 = vadd.f32 %v1401, %v1480
    %v1488 = vxor.u32 %v1484, 2147483648
    %v1489 = vmul.f32 %v1488, 1.442695
    %v1490 = vpow.pop %v1489
    %v1491 = vadd.f32 %v1490, 1.0
    %v1492 = vrcp.pop %v1491
    %v1493 = vmul.f32 1.0, %v1492
    %v1494 = vxor.u32 %v1485, 2147483648
    %v1495 = vmul.f32 %v1494, 1.442695
    %v1496 = vpow.pop %v1495
    %v1497 = vadd.f32 %v1496, 1.0
    %v1498 = vrcp.pop %v1497
    %v1499 = vmul.f32 1.0, %v1498
    %v1500 = vtanh.pop %v1486
    %v1501 = vxor.u32 %v1487, 2147483648
    %v1502 = vmul.f32 %v1501, 1.442695
    %v1503 = vpow.pop %v1502
    %v1504 = vadd.f32 %v1503, 1.0
    %v1505 = vrcp.pop %v1504
    %v1506 = vmul.f32 1.0, %v1505
    %v1507 = vmul.f32 %v1499, %v1389
    %v1508 = vmul.f32 %v1493, %v1500
    %v1509 = vadd.f32 %v1507, %v1508
    %v1510 = vtanh.pop %v1509
    %v1511 = vmul.f32 %v1506, %v1510
    %v1512 = vpack.c.bf16 %v1511, %v1511
    %s1513 = scalar_lea.vmem [#allocation9], 24
    %1514 = vst [vmem:[%s1513] sm:$0xf] %v1512
    %s1515 = smul.u32 7, 4
    %s1516 = smul.addr %s1515, 8
    %s1517 = scalar_lea.vmem [#allocation2], %s1516
    %v1518 = vld [vmem:[%s1517] sm:$0xff]
    %v1519 = vld [vmem:[%s1517 + $0x8] sm:$0xff]
    %v1520 = vld [vmem:[%s1517 + $0x10] sm:$0xff]
    %v1521 = vld [vmem:[%s1517 + $0x18] sm:$0xff]
    %1522 = vmatprep.subr.bf16.mxu0 %v648
    %1523 = vmatpush1.bf16.msra.mxu0 %v647
    %1524 = vmatprep.subr.bf16.mxu0 %v644
    %1525 = vmatpush1.bf16.msra.mxu0 %v643
    %1526 = vmatprep.subr.bf16.mxu0 %v640
    %1527 = vmatpush1.bf16.msra.mxu0 %v639
    %1528 = vmatprep.subr.bf16.mxu0 %v636
    %1529 = vmatpush1.bf16.msra.mxu0 %v635
    %1530 = vmatprep.subr.bf16.mxu0 %v632
    %1531 = vmatpush1.bf16.msra.mxu0 %v631
    %1532 = vmatprep.subr.bf16.mxu0 %v628
    %1533 = vmatpush1.bf16.msra.mxu0 %v627
    %1534 = vmatprep.subr.bf16.mxu0 %v624
    %1535 = vmatpush1.bf16.msra.mxu0 %v623
    %1536 = vmatprep.subr.bf16.mxu0 %v620
    %1537 = vmatpush1.bf16.msra.mxu0 %v619
    %1538 = vmatprep.subr.bf16.mxu0 0
    %1539 = vmatpush2.bf16.msra.mxu0 0
    %1540 = vmatprep.subr.bf16.mxu0 0
    %1541 = vmatpush2.bf16.msra.mxu0 0
    %1542 = vmatprep.subr.bf16.mxu0 0
    %1543 = vmatpush2.bf16.msra.mxu0 0
    %1544 = vmatprep.subr.bf16.mxu0 0
    %1545 = vmatpush2.bf16.msra.mxu0 0
    %1546 = vmatprep.subr.bf16.mxu0 0
    %1547 = vmatpush2.bf16.msra.mxu0 0
    %1548 = vmatprep.subr.bf16.mxu0 0
    %1549 = vmatpush2.bf16.msra.mxu0 0
    %1550 = vmatprep.subr.bf16.mxu0 0
    %1551 = vmatpush2.bf16.msra.mxu0 0
    %1552 = vmatprep.subr.bf16.mxu0 0
    %1553 = vmatpush2.bf16.msra.mxu0 0
    %1554 = vmatprep.mubr.bf16.mxu0 0
    %1555 = vmatmul.mubr.bf16.gmra.mxu0 %v1512
    %v1556 = vpop.f32.mrf.mxu0
    %v1557 = vadd.f32 0.0, %v1556
    %v1558 = vpop.f32.mrf.mxu0
    %v1559 = vadd.f32 0.0, %v1558
    %v1560 = vpop.f32.mrf.mxu0
    %v1561 = vpop.f32.mrf.mxu0
    %1562 = vdwg.mxu0
    %1563 = vmatprep.subr.bf16.mxu0 %v650
    %1564 = vmatpush1.bf16.msra.mxu0 %v649
    %1565 = vmatprep.subr.bf16.mxu0 %v646
    %1566 = vmatpush1.bf16.msra.mxu0 %v645
    %1567 = vmatprep.subr.bf16.mxu0 %v642
    %1568 = vmatpush1.bf16.msra.mxu0 %v641
    %1569 = vmatprep.subr.bf16.mxu0 %v638
    %1570 = vmatpush1.bf16.msra.mxu0 %v637
    %1571 = vmatprep.subr.bf16.mxu0 %v634
    %1572 = vmatpush1.bf16.msra.mxu0 %v633
    %1573 = vmatprep.subr.bf16.mxu0 %v630
    %1574 = vmatpush1.bf16.msra.mxu0 %v629
    %1575 = vmatprep.subr.bf16.mxu0 %v626
    %1576 = vmatpush1.bf16.msra.mxu0 %v625
    %1577 = vmatprep.subr.bf16.mxu0 %v622
    %1578 = vmatpush1.bf16.msra.mxu0 %v621
    %1579 = vmatprep.subr.bf16.mxu0 0
    %1580 = vmatpush2.bf16.msra.mxu0 0
    %1581 = vmatprep.subr.bf16.mxu0 0
    %1582 = vmatpush2.bf16.msra.mxu0 0
    %1583 = vmatprep.subr.bf16.mxu0 0
    %1584 = vmatpush2.bf16.msra.mxu0 0
    %1585 = vmatprep.subr.bf16.mxu0 0
    %1586 = vmatpush2.bf16.msra.mxu0 0
    %1587 = vmatprep.subr.bf16.mxu0 0
    %1588 = vmatpush2.bf16.msra.mxu0 0
    %1589 = vmatprep.subr.bf16.mxu0 0
    %1590 = vmatpush2.bf16.msra.mxu0 0
    %1591 = vmatprep.subr.bf16.mxu0 0
    %1592 = vmatpush2.bf16.msra.mxu0 0
    %1593 = vmatprep.subr.bf16.mxu0 0
    %1594 = vmatpush2.bf16.msra.mxu0 0
    %1595 = vmatprep.mubr.bf16.mxu0 0
    %1596 = vmatmul.mubr.bf16.gmra.mxu0 %v1512
    %v1597 = vpop.f32.mrf.mxu0
    %v1598 = vadd.f32 0.0, %v1597
    %v1599 = vpop.f32.mrf.mxu0
    %v1600 = vadd.f32 0.0, %v1599
    %v1601 = vpop.f32.mrf.mxu0
    %v1602 = vpop.f32.mrf.mxu0
    %1603 = vdwg.mxu0
    %v1604 = vadd.f32 %v1518, %v1557
    %v1605 = vadd.f32 %v1519, %v1559
    %v1606 = vadd.f32 %v1520, %v1598
    %v1607 = vadd.f32 %v1521, %v1600
    %v1608 = vxor.u32 %v1604, 2147483648
    %v1609 = vmul.f32 %v1608, 1.442695
    %v1610 = vpow.pop %v1609
    %v1611 = vadd.f32 %v1610, 1.0
    %v1612 = vrcp.pop %v1611
    %v1613 = vmul.f32 1.0, %v1612
    %v1614 = vxor.u32 %v1605, 2147483648
    %v1615 = vmul.f32 %v1614, 1.442695
    %v1616 = vpow.pop %v1615
    %v1617 = vadd.f32 %v1616, 1.0
    %v1618 = vrcp.pop %v1617
    %v1619 = vmul.f32 1.0, %v1618
    %v1620 = vtanh.pop %v1606
    %v1621 = vxor.u32 %v1607, 2147483648
    %v1622 = vmul.f32 %v1621, 1.442695
    %v1623 = vpow.pop %v1622
    %v1624 = vadd.f32 %v1623, 1.0
    %v1625 = vrcp.pop %v1624
    %v1626 = vmul.f32 1.0, %v1625
    %v1627 = vmul.f32 %v1619, %v1509
    %v1628 = vmul.f32 %v1613, %v1620
    %v1629 = vadd.f32 %v1627, %v1628
    %v1630 = vtanh.pop %v1629
    %v1631 = vmul.f32 %v1626, %v1630
    %v1632 = vpack.c.bf16 %v1631, %v1631
    %s1633 = scalar_lea.vmem [#allocation9], 28
    %1634 = vst [vmem:[%s1633] sm:$0xf] %v1632
    // Predicated region
    $region30: #{tpu_custom_call.1} parent=1 // pred_check
      _
    $region31: #{tpu_custom_call.1} parent=1 // pred_check_branch
      %1636 = sbr.rel (0) target = $region33
    $region32: #{tpu_custom_call.1} parent=1 // pred_region
      %s1638 = ssub.s32 512, 512
      %1639 = vsyncadd [#allocation5], %s1638
      %s1640 = sshll.u32 [#allocation9], 4
      %s1641 = int_to_ptr.vmem [resolvable:$true] %s1640
      %1646 = dma.vmem_to_hbm [thread:$0]  %s1641, 512, %s4, [#allocation5], 64, 64, 4
    $region33: #{tpu_custom_call.1} parent=1 // pred_fallthru
      _
    // Predicated region
    $region34: #{tpu_custom_call.1} parent=1 // pred_check
      _
    $region35: #{tpu_custom_call.1} parent=1 // pred_check_branch
      %1648 = sbr.rel (0) target = $region37
    $region36: #{tpu_custom_call.1} parent=1 // pred_region
      %1649 = dma.done [#allocation5], 512
    $region37: #{tpu_custom_call.1} parent=1 // pred_fallthru
      _
    %1650 = vsyncpa [#allocation4], 1
    %1651 = vsyncpa [#allocation7], 1
    %1652 = vsyncpa [#allocation5], 1

</llo_original>
